<compile_context>
chip_gen: v7x
topology: tpu7x:2x2x1
jax: 0.10.0
libtpu: 0.0.40
codegen_flags: <defaults>
</compile_context>

<pallas_src>
import jax
import jax.numpy as jnp
import numpy as np
from jax.experimental import pallas as pl
from jax.experimental.pallas import tpu as pltpu


def _make_recovery_kernel(T: int, B: int):
    """Build the kernel with static T (timesteps) and B (batch) baked in."""

    def kernel(x_ref, wih_ref, whh_ref, bih_ref, bhn_ref,
               wout_ref, bout_ref, o_ref, seq):
        """GRU stack + Linear + Sigmoid, fully 2-D, time-major flattened.

        x_ref   : (T*B, H)   layer-0 input, row t*B+b = x[b, t, :]
        wih_ref : (L, H, 3H) fused input-to-hidden weights [r|z|n] (transposed)
        whh_ref : (L, H, 3H) fused hidden-to-hidden weights [r|z|n] (transposed)
        bih_ref : (L, 1, 3H) folded input biases: [b_ir+b_hr | b_iz+b_hz | b_in]
        bhn_ref : (L, 1, H)  recurrent n-gate bias b_hn (must stay inside r·(...))
        wout_ref: (H, F), bout_ref: (1, F)
        o_ref   : (T*B, F)
        seq     : VMEM scratch (T*B, H) f32 — per-layer hidden-state sequence
        """
        TB, H = seq.shape
        L = wih_ref.shape[0]
        H2 = 2 * H

        inp = x_ref[...].astype(jnp.float32)            # (T*B, H)

        for l in range(L):                               # static layer loop
            # ---- hoisted input projections: ONE wide MXU call per layer ----
            # (biases for r/z already include b_hr/b_hz; n part is b_in only)
            xp = jnp.dot(inp, wih_ref[l],
                         preferred_element_type=jnp.float32) + bih_ref[l]

            whh_l = whh_ref[l]                                     # (H, 3H)
            bhn_l = jnp.broadcast_to(bhn_ref[l], (B, H))           # hoisted

            h = jnp.zeros((B, H), dtype=jnp.float32)
            for t in range(T):                           # static unroll
                xp_t = xp[t * B:(t + 1) * B, :]          # (B, 3H) vreg slice
                # single fused recurrent matmul per step, no bias add
                hp = jnp.dot(h, whh_l, preferred_element_type=jnp.float32)
                # fused r|z sigmoid: one EUP call over the contiguous 2H slice
                rz = jax.nn.sigmoid(xp_t[:, :H2] + hp[:, :H2])
                r = rz[:, :H]
                z = rz[:, H:]
                n = jnp.tanh(xp_t[:, H2:] + r * (hp[:, H2:] + bhn_l))
                h = (1.0 - z) * n + z * h
                # off-critical-path store of this step's output
                seq[t * B:(t + 1) * B, :] = h

            inp = seq[...]                               # next layer's input

        # ---- final Linear + Sigmoid over all T*B rows, single 2-D store ----
        logits = jnp.dot(inp, wout_ref[...],
                         preferred_element_type=jnp.float32) + bout_ref[...]
        o_ref[...] = jax.nn.sigmoid(logits).astype(o_ref.dtype)

    return kernel


def recovery_forward(x, kparams):
    """x: (B, T, H) batch_first, like the PyTorch module. Returns (B, T, F)."""
    B, T, H = x.shape
    F = kparams["wout"].shape[-1]
    # time-major flatten: one small XLA copy; everything in-kernel stays 2-D
    x_tm = jnp.transpose(x, (1, 0, 2)).reshape(T * B, H)

    vmem = pl.BlockSpec(memory_space=pltpu.MemorySpace.VMEM)
    out_flat = pl.pallas_call(
        _make_recovery_kernel(T, B),
        out_shape=jax.ShapeDtypeStruct((T * B, F), x.dtype),
        in_specs=[vmem] * 7,
        out_specs=vmem,
        scratch_shapes=[pltpu.VMEM((T * B, H), jnp.float32)],
    )(x_tm, kparams["wih"], kparams["whh"], kparams["bih_folded"],
      kparams["bhn"], kparams["wout"], kparams["bout"])

    return jnp.transpose(out_flat.reshape(T, B, F), (1, 0, 2))


def init_params(key, input_features, hidden_dim, num_layers):
    """Deterministic synthetic params, PyTorch-style U(-1/sqrt(H), 1/sqrt(H)).

    Weights stored fused & transposed: (L, H, 3H), gate order [r|z|n],
    matching torch.nn.GRU's weight_{ih,hh}_l{l}.T layout."""
    H = hidden_dim
    k = 1.0 / np.sqrt(H)
    ks = jax.random.split(key, 6)
    u = lambda kk, shape: jax.random.uniform(kk, shape, jnp.float32, -k, k)
    return dict(
        wih=u(ks[0], (num_layers, H, 3 * H)),
        whh=u(ks[1], (num_layers, H, 3 * H)),
        bih=u(ks[2], (num_layers, 1, 3 * H)),
        bhh=u(ks[3], (num_layers, 1, 3 * H)),
        wout=u(ks[4], (H, input_features)),
        bout=u(ks[5], (1, input_features)),
    )


def pack_kernel_params(params):
    """Fold b_hr/b_hz into the input bias (additive with b_ir/b_iz);
    b_hn is kept separate — it must stay inside r·(W_hn h + b_hn)."""
    H = params["wih"].shape[1]
    bih, bhh = params["bih"], params["bhh"]
    bih_folded = jnp.concatenate(
        [bih[:, :, :2 * H] + bhh[:, :, :2 * H], bih[:, :, 2 * H:]], axis=-1)
    return dict(
        wih=params["wih"], whh=params["whh"],
        bih_folded=bih_folded, bhn=bhh[:, :, 2 * H:],
        wout=params["wout"], bout=params["bout"],
    )


def recovery_reference(x, params):
    """Pure-JAX reference (mirrors torch.nn.GRU + Linear + Sigmoid)."""
    B, T, H = x.shape
    seq = x.astype(jnp.float32)
    L = params["wih"].shape[0]
    for l in range(L):
        wih, whh = params["wih"][l], params["whh"][l]
        bih, bhh = params["bih"][l], params["bhh"][l]

        def step(h, x_t, wih=wih, whh=whh, bih=bih, bhh=bhh):
            xp = x_t @ wih + bih
            hp = h @ whh + bhh
            r = jax.nn.sigmoid(xp[:, :H] + hp[:, :H])
            z = jax.nn.sigmoid(xp[:, H:2 * H] + hp[:, H:2 * H])
            n = jnp.tanh(xp[:, 2 * H:] + r * hp[:, 2 * H:])
            h_new = (1.0 - z) * n + z * h
            return h_new, h_new

        _, outs = jax.lax.scan(step, jnp.zeros((B, H), jnp.float32),
                               jnp.transpose(seq, (1, 0, 2)))
        seq = jnp.transpose(outs, (1, 0, 2))
    return jax.nn.sigmoid(seq @ params["wout"] + params["bout"])


if __name__ == "__main__":
    # Module config: Recovery('gru', input_features=4, hidden_dim=32, num_layers=2)
    batch, seq_len, hidden_dim, input_features, num_layers = 2, 8, 32, 4, 2

    key = jax.random.PRNGKey(0)
    kx, kp = jax.random.split(key)
    x = jax.random.normal(kx, (batch, seq_len, hidden_dim), jnp.float32)
    params = init_params(kp, input_features, hidden_dim, num_layers)
    kparams = pack_kernel_params(params)

    fwd = jax.jit(recovery_forward)
    out = jax.block_until_ready(fwd(x, kparams))
    assert out.shape == (batch, seq_len, input_features), out.shape

    ref = jax.block_until_ready(recovery_reference(x, params))
    np.testing.assert_allclose(np.asarray(out), np.asarray(ref),
                               rtol=1e-3, atol=1e-3)
    print("KERNEL_OK")
</pallas_src>

<mosaic_0001>
module attributes {stable_mosaic.version = 11 : i64} {
  func.func @kernel(%arg0: memref<16x32xf32, #tpu.memory_space<vmem>>, %arg1: memref<2x32x96xf32, #tpu.memory_space<vmem>>, %arg2: memref<2x32x96xf32, #tpu.memory_space<vmem>>, %arg3: memref<2x1x96xf32, #tpu.memory_space<vmem>>, %arg4: memref<2x1x32xf32, #tpu.memory_space<vmem>>, %arg5: memref<32x4xf32, #tpu.memory_space<vmem>>, %arg6: memref<1x4xf32, #tpu.memory_space<vmem>>, %arg7: memref<16x4xf32, #tpu.memory_space<vmem>>, %arg8: memref<16x32xf32, #tpu.memory_space<vmem>>) attributes {dimension_semantics = [], scalar_prefetch = 0 : i64, scratch_operands = 1 : i64, tpu.core_type = #tpu.core_type<tc>} {
    %c0 = arith.constant 0 : index
    %c0_0 = arith.constant 0 : index
    %0 = vector.load %arg0[%c0, %c0_0] : memref<16x32xf32, #tpu.memory_space<vmem>>, vector<16x32xf32>
    %c0_1 = arith.constant 0 : index
    %c0_2 = arith.constant 0 : index
    %c0_3 = arith.constant 0 : index
    %1 = vector.load %arg1[%c0_1, %c0_2, %c0_3] : memref<2x32x96xf32, #tpu.memory_space<vmem>>, vector<1x32x96xf32>
    %2 = vector.shape_cast %1 : vector<1x32x96xf32> to vector<32x96xf32>
    %cst = arith.constant dense<0.000000e+00> : vector<16x96xf32>
    %3 = tpu.matmul %0, %2, %cst {dimension_numbers = #tpu.dot_dimension_numbers<[1], [0], [0], [1], [0, 0, 1, 1], [], []>} : vector<16x32xf32>, vector<32x96xf32>, vector<16x96xf32> -> vector<16x96xf32>
    %c0_4 = arith.constant 0 : index
    %c0_5 = arith.constant 0 : index
    %c0_6 = arith.constant 0 : index
    %4 = vector.load %arg3[%c0_4, %c0_5, %c0_6] : memref<2x1x96xf32, #tpu.memory_space<vmem>>, vector<1x1x96xf32>
    %5 = vector.shape_cast %4 : vector<1x1x96xf32> to vector<1x96xf32>
    %6 = vector.broadcast %5 : vector<1x96xf32> to vector<16x96xf32>
    %7 = arith.addf %3, %6 : vector<16x96xf32>
    %c0_7 = arith.constant 0 : index
    %c0_8 = arith.constant 0 : index
    %c0_9 = arith.constant 0 : index
    %8 = vector.load %arg2[%c0_7, %c0_8, %c0_9] : memref<2x32x96xf32, #tpu.memory_space<vmem>>, vector<1x32x96xf32>
    %9 = vector.shape_cast %8 : vector<1x32x96xf32> to vector<32x96xf32>
    %c0_10 = arith.constant 0 : index
    %c0_11 = arith.constant 0 : index
    %c0_12 = arith.constant 0 : index
    %10 = vector.load %arg4[%c0_10, %c0_11, %c0_12] : memref<2x1x32xf32, #tpu.memory_space<vmem>>, vector<1x1x32xf32>
    %11 = vector.shape_cast %10 : vector<1x1x32xf32> to vector<1x32xf32>
    %12 = vector.shape_cast %11 : vector<1x32xf32> to vector<1x32xf32>
    %13 = vector.broadcast %12 : vector<1x32xf32> to vector<2x32xf32>
    %cst_13 = arith.constant 0.000000e+00 : f32
    %14 = vector.broadcast %cst_13 : f32 to vector<2x32xf32>
    %15 = vector.extract_strided_slice %7 {offsets = [0, 0], sizes = [2, 96], strides = [1, 1]} : vector<16x96xf32> to vector<2x96xf32>
    %cst_14 = arith.constant dense<0.000000e+00> : vector<2x96xf32>
    %16 = tpu.matmul %14, %9, %cst_14 {dimension_numbers = #tpu.dot_dimension_numbers<[1], [0], [0], [1], [0, 0, 1, 1], [], []>} : vector<2x32xf32>, vector<32x96xf32>, vector<2x96xf32> -> vector<2x96xf32>
    %17 = vector.extract_strided_slice %15 {offsets = [0, 0], sizes = [2, 64], strides = [1, 1]} : vector<2x96xf32> to vector<2x64xf32>
    %18 = vector.extract_strided_slice %16 {offsets = [0, 0], sizes = [2, 64], strides = [1, 1]} : vector<2x96xf32> to vector<2x64xf32>
    %19 = arith.addf %17, %18 : vector<2x64xf32>
    %20 = arith.negf %19 : vector<2x64xf32>
    %21 = math.exp %20 : vector<2x64xf32>
    %cst_15 = arith.constant 1.000000e+00 : f32
    %22 = vector.broadcast %cst_15 : f32 to vector<2x64xf32>
    %23 = arith.addf %22, %21 : vector<2x64xf32>
    %24 = arith.divf %22, %23 : vector<2x64xf32>
    %25 = vector.extract_strided_slice %24 {offsets = [0, 0], sizes = [2, 32], strides = [1, 1]} : vector<2x64xf32> to vector<2x32xf32>
    %26 = vector.extract_strided_slice %24 {offsets = [0, 32], sizes = [2, 32], strides = [1, 1]} : vector<2x64xf32> to vector<2x32xf32>
    %27 = vector.extract_strided_slice %15 {offsets = [0, 64], sizes = [2, 32], strides = [1, 1]} : vector<2x96xf32> to vector<2x32xf32>
    %28 = vector.extract_strided_slice %16 {offsets = [0, 64], sizes = [2, 32], strides = [1, 1]} : vector<2x96xf32> to vector<2x32xf32>
    %29 = arith.addf %28, %13 : vector<2x32xf32>
    %30 = arith.mulf %25, %29 : vector<2x32xf32>
    %31 = arith.addf %27, %30 : vector<2x32xf32>
    %32 = math.tanh %31 : vector<2x32xf32>
    %cst_16 = arith.constant 1.000000e+00 : f32
    %33 = vector.broadcast %cst_16 : f32 to vector<2x32xf32>
    %34 = arith.subf %33, %26 : vector<2x32xf32>
    %35 = arith.mulf %34, %32 : vector<2x32xf32>
    %36 = arith.mulf %26, %14 : vector<2x32xf32>
    %37 = arith.addf %35, %36 : vector<2x32xf32>
    %c0_17 = arith.constant 0 : index
    %c0_18 = arith.constant 0 : index
    %38 = vector.load %arg8[%c0_17, %c0_18] : memref<16x32xf32, #tpu.memory_space<vmem>>, vector<2x32xf32>
    tpu.vector_store %arg8[%c0_17, %c0_18], %37 {strides = array<i32>} : memref<16x32xf32, #tpu.memory_space<vmem>>, vector<2x32xf32>,
    %39 = vector.extract_strided_slice %7 {offsets = [2, 0], sizes = [2, 96], strides = [1, 1]} : vector<16x96xf32> to vector<2x96xf32>
    %cst_19 = arith.constant dense<0.000000e+00> : vector<2x96xf32>
    %40 = tpu.matmul %37, %9, %cst_19 {dimension_numbers = #tpu.dot_dimension_numbers<[1], [0], [0], [1], [0, 0, 1, 1], [], []>} : vector<2x32xf32>, vector<32x96xf32>, vector<2x96xf32> -> vector<2x96xf32>
    %41 = vector.extract_strided_slice %39 {offsets = [0, 0], sizes = [2, 64], strides = [1, 1]} : vector<2x96xf32> to vector<2x64xf32>
    %42 = vector.extract_strided_slice %40 {offsets = [0, 0], sizes = [2, 64], strides = [1, 1]} : vector<2x96xf32> to vector<2x64xf32>
    %43 = arith.addf %41, %42 : vector<2x64xf32>
    %44 = arith.negf %43 : vector<2x64xf32>
    %45 = math.exp %44 : vector<2x64xf32>
    %cst_20 = arith.constant 1.000000e+00 : f32
    %46 = vector.broadcast %cst_20 : f32 to vector<2x64xf32>
    %47 = arith.addf %46, %45 : vector<2x64xf32>
    %48 = arith.divf %46, %47 : vector<2x64xf32>
    %49 = vector.extract_strided_slice %48 {offsets = [0, 0], sizes = [2, 32], strides = [1, 1]} : vector<2x64xf32> to vector<2x32xf32>
    %50 = vector.extract_strided_slice %48 {offsets = [0, 32], sizes = [2, 32], strides = [1, 1]} : vector<2x64xf32> to vector<2x32xf32>
    %51 = vector.extract_strided_slice %39 {offsets = [0, 64], sizes = [2, 32], strides = [1, 1]} : vector<2x96xf32> to vector<2x32xf32>
    %52 = vector.extract_strided_slice %40 {offsets = [0, 64], sizes = [2, 32], strides = [1, 1]} : vector<2x96xf32> to vector<2x32xf32>
    %53 = arith.addf %52, %13 : vector<2x32xf32>
    %54 = arith.mulf %49, %53 : vector<2x32xf32>
    %55 = arith.addf %51, %54 : vector<2x32xf32>
    %56 = math.tanh %55 : vector<2x32xf32>
    %cst_21 = arith.constant 1.000000e+00 : f32
    %57 = vector.broadcast %cst_21 : f32 to vector<2x32xf32>
    %58 = arith.subf %57, %50 : vector<2x32xf32>
    %59 = arith.mulf %58, %56 : vector<2x32xf32>
    %60 = arith.mulf %50, %37 : vector<2x32xf32>
    %61 = arith.addf %59, %60 : vector<2x32xf32>
    %c2 = arith.constant 2 : index
    %c0_22 = arith.constant 0 : index
    %62 = vector.load %arg8[%c2, %c0_22] : memref<16x32xf32, #tpu.memory_space<vmem>>, vector<2x32xf32>
    tpu.vector_store %arg8[%c2, %c0_22], %61 {strides = array<i32>} : memref<16x32xf32, #tpu.memory_space<vmem>>, vector<2x32xf32>,
    %63 = vector.extract_strided_slice %7 {offsets = [4, 0], sizes = [2, 96], strides = [1, 1]} : vector<16x96xf32> to vector<2x96xf32>
    %cst_23 = arith.constant dense<0.000000e+00> : vector<2x96xf32>
    %64 = tpu.matmul %61, %9, %cst_23 {dimension_numbers = #tpu.dot_dimension_numbers<[1], [0], [0], [1], [0, 0, 1, 1], [], []>} : vector<2x32xf32>, vector<32x96xf32>, vector<2x96xf32> -> vector<2x96xf32>
    %65 = vector.extract_strided_slice %63 {offsets = [0, 0], sizes = [2, 64], strides = [1, 1]} : vector<2x96xf32> to vector<2x64xf32>
    %66 = vector.extract_strided_slice %64 {offsets = [0, 0], sizes = [2, 64], strides = [1, 1]} : vector<2x96xf32> to vector<2x64xf32>
    %67 = arith.addf %65, %66 : vector<2x64xf32>
    %68 = arith.negf %67 : vector<2x64xf32>
    %69 = math.exp %68 : vector<2x64xf32>
    %cst_24 = arith.constant 1.000000e+00 : f32
    %70 = vector.broadcast %cst_24 : f32 to vector<2x64xf32>
    %71 = arith.addf %70, %69 : vector<2x64xf32>
    %72 = arith.divf %70, %71 : vector<2x64xf32>
    %73 = vector.extract_strided_slice %72 {offsets = [0, 0], sizes = [2, 32], strides = [1, 1]} : vector<2x64xf32> to vector<2x32xf32>
    %74 = vector.extract_strided_slice %72 {offsets = [0, 32], sizes = [2, 32], strides = [1, 1]} : vector<2x64xf32> to vector<2x32xf32>
    %75 = vector.extract_strided_slice %63 {offsets = [0, 64], sizes = [2, 32], strides = [1, 1]} : vector<2x96xf32> to vector<2x32xf32>
    %76 = vector.extract_strided_slice %64 {offsets = [0, 64], sizes = [2, 32], strides = [1, 1]} : vector<2x96xf32> to vector<2x32xf32>
    %77 = arith.addf %76, %13 : vector<2x32xf32>
    %78 = arith.mulf %73, %77 : vector<2x32xf32>
    %79 = arith.addf %75, %78 : vector<2x32xf32>
    %80 = math.tanh %79 : vector<2x32xf32>
    %cst_25 = arith.constant 1.000000e+00 : f32
    %81 = vector.broadcast %cst_25 : f32 to vector<2x32xf32>
    %82 = arith.subf %81, %74 : vector<2x32xf32>
    %83 = arith.mulf %82, %80 : vector<2x32xf32>
    %84 = arith.mulf %74, %61 : vector<2x32xf32>
    %85 = arith.addf %83, %84 : vector<2x32xf32>
    %c4 = arith.constant 4 : index
    %c0_26 = arith.constant 0 : index
    %86 = vector.load %arg8[%c4, %c0_26] : memref<16x32xf32, #tpu.memory_space<vmem>>, vector<2x32xf32>
    tpu.vector_store %arg8[%c4, %c0_26], %85 {strides = array<i32>} : memref<16x32xf32, #tpu.memory_space<vmem>>, vector<2x32xf32>,
    %87 = vector.extract_strided_slice %7 {offsets = [6, 0], sizes = [2, 96], strides = [1, 1]} : vector<16x96xf32> to vector<2x96xf32>
    %cst_27 = arith.constant dense<0.000000e+00> : vector<2x96xf32>
    %88 = tpu.matmul %85, %9, %cst_27 {dimension_numbers = #tpu.dot_dimension_numbers<[1], [0], [0], [1], [0, 0, 1, 1], [], []>} : vector<2x32xf32>, vector<32x96xf32>, vector<2x96xf32> -> vector<2x96xf32>
    %89 = vector.extract_strided_slice %87 {offsets = [0, 0], sizes = [2, 64], strides = [1, 1]} : vector<2x96xf32> to vector<2x64xf32>
    %90 = vector.extract_strided_slice %88 {offsets = [0, 0], sizes = [2, 64], strides = [1, 1]} : vector<2x96xf32> to vector<2x64xf32>
    %91 = arith.addf %89, %90 : vector<2x64xf32>
    %92 = arith.negf %91 : vector<2x64xf32>
    %93 = math.exp %92 : vector<2x64xf32>
    %cst_28 = arith.constant 1.000000e+00 : f32
    %94 = vector.broadcast %cst_28 : f32 to vector<2x64xf32>
    %95 = arith.addf %94, %93 : vector<2x64xf32>
    %96 = arith.divf %94, %95 : vector<2x64xf32>
    %97 = vector.extract_strided_slice %96 {offsets = [0, 0], sizes = [2, 32], strides = [1, 1]} : vector<2x64xf32> to vector<2x32xf32>
    %98 = vector.extract_strided_slice %96 {offsets = [0, 32], sizes = [2, 32], strides = [1, 1]} : vector<2x64xf32> to vector<2x32xf32>
    %99 = vector.extract_strided_slice %87 {offsets = [0, 64], sizes = [2, 32], strides = [1, 1]} : vector<2x96xf32> to vector<2x32xf32>
    %100 = vector.extract_strided_slice %88 {offsets = [0, 64], sizes = [2, 32], strides = [1, 1]} : vector<2x96xf32> to vector<2x32xf32>
    %101 = arith.addf %100, %13 : vector<2x32xf32>
    %102 = arith.mulf %97, %101 : vector<2x32xf32>
    %103 = arith.addf %99, %102 : vector<2x32xf32>
    %104 = math.tanh %103 : vector<2x32xf32>
    %cst_29 = arith.constant 1.000000e+00 : f32
    %105 = vector.broadcast %cst_29 : f32 to vector<2x32xf32>
    %106 = arith.subf %105, %98 : vector<2x32xf32>
    %107 = arith.mulf %106, %104 : vector<2x32xf32>
    %108 = arith.mulf %98, %85 : vector<2x32xf32>
    %109 = arith.addf %107, %108 : vector<2x32xf32>
    %c6 = arith.constant 6 : index
    %c0_30 = arith.constant 0 : index
    %110 = vector.load %arg8[%c6, %c0_30] : memref<16x32xf32, #tpu.memory_space<vmem>>, vector<2x32xf32>
    tpu.vector_store %arg8[%c6, %c0_30], %109 {strides = array<i32>} : memref<16x32xf32, #tpu.memory_space<vmem>>, vector<2x32xf32>,
    %111 = vector.extract_strided_slice %7 {offsets = [8, 0], sizes = [2, 96], strides = [1, 1]} : vector<16x96xf32> to vector<2x96xf32>
    %cst_31 = arith.constant dense<0.000000e+00> : vector<2x96xf32>
    %112 = tpu.matmul %109, %9, %cst_31 {dimension_numbers = #tpu.dot_dimension_numbers<[1], [0], [0], [1], [0, 0, 1, 1], [], []>} : vector<2x32xf32>, vector<32x96xf32>, vector<2x96xf32> -> vector<2x96xf32>
    %113 = vector.extract_strided_slice %111 {offsets = [0, 0], sizes = [2, 64], strides = [1, 1]} : vector<2x96xf32> to vector<2x64xf32>
    %114 = vector.extract_strided_slice %112 {offsets = [0, 0], sizes = [2, 64], strides = [1, 1]} : vector<2x96xf32> to vector<2x64xf32>
    %115 = arith.addf %113, %114 : vector<2x64xf32>
    %116 = arith.negf %115 : vector<2x64xf32>
    %117 = math.exp %116 : vector<2x64xf32>
    %cst_32 = arith.constant 1.000000e+00 : f32
    %118 = vector.broadcast %cst_32 : f32 to vector<2x64xf32>
    %119 = arith.addf %118, %117 : vector<2x64xf32>
    %120 = arith.divf %118, %119 : vector<2x64xf32>
    %121 = vector.extract_strided_slice %120 {offsets = [0, 0], sizes = [2, 32], strides = [1, 1]} : vector<2x64xf32> to vector<2x32xf32>
    %122 = vector.extract_strided_slice %120 {offsets = [0, 32], sizes = [2, 32], strides = [1, 1]} : vector<2x64xf32> to vector<2x32xf32>
    %123 = vector.extract_strided_slice %111 {offsets = [0, 64], sizes = [2, 32], strides = [1, 1]} : vector<2x96xf32> to vector<2x32xf32>
    %124 = vector.extract_strided_slice %112 {offsets = [0, 64], sizes = [2, 32], strides = [1, 1]} : vector<2x96xf32> to vector<2x32xf32>
    %125 = arith.addf %124, %13 : vector<2x32xf32>
    %126 = arith.mulf %121, %125 : vector<2x32xf32>
    %127 = arith.addf %123, %126 : vector<2x32xf32>
    %128 = math.tanh %127 : vector<2x32xf32>
    %cst_33 = arith.constant 1.000000e+00 : f32
    %129 = vector.broadcast %cst_33 : f32 to vector<2x32xf32>
    %130 = arith.subf %129, %122 : vector<2x32xf32>
    %131 = arith.mulf %130, %128 : vector<2x32xf32>
    %132 = arith.mulf %122, %109 : vector<2x32xf32>
    %133 = arith.addf %131, %132 : vector<2x32xf32>
    %c8 = arith.constant 8 : index
    %c0_34 = arith.constant 0 : index
    %134 = vector.load %arg8[%c8, %c0_34] : memref<16x32xf32, #tpu.memory_space<vmem>>, vector<2x32xf32>
    tpu.vector_store %arg8[%c8, %c0_34], %133 {strides = array<i32>} : memref<16x32xf32, #tpu.memory_space<vmem>>, vector<2x32xf32>,
    %135 = vector.extract_strided_slice %7 {offsets = [10, 0], sizes = [2, 96], strides = [1, 1]} : vector<16x96xf32> to vector<2x96xf32>
    %cst_35 = arith.constant dense<0.000000e+00> : vector<2x96xf32>
    %136 = tpu.matmul %133, %9, %cst_35 {dimension_numbers = #tpu.dot_dimension_numbers<[1], [0], [0], [1], [0, 0, 1, 1], [], []>} : vector<2x32xf32>, vector<32x96xf32>, vector<2x96xf32> -> vector<2x96xf32>
    %137 = vector.extract_strided_slice %135 {offsets = [0, 0], sizes = [2, 64], strides = [1, 1]} : vector<2x96xf32> to vector<2x64xf32>
    %138 = vector.extract_strided_slice %136 {offsets = [0, 0], sizes = [2, 64], strides = [1, 1]} : vector<2x96xf32> to vector<2x64xf32>
    %139 = arith.addf %137, %138 : vector<2x64xf32>
    %140 = arith.negf %139 : vector<2x64xf32>
    %141 = math.exp %140 : vector<2x64xf32>
    %cst_36 = arith.constant 1.000000e+00 : f32
    %142 = vector.broadcast %cst_36 : f32 to vector<2x64xf32>
    %143 = arith.addf %142, %141 : vector<2x64xf32>
    %144 = arith.divf %142, %143 : vector<2x64xf32>
    %145 = vector.extract_strided_slice %144 {offsets = [0, 0], sizes = [2, 32], strides = [1, 1]} : vector<2x64xf32> to vector<2x32xf32>
    %146 = vector.extract_strided_slice %144 {offsets = [0, 32], sizes = [2, 32], strides = [1, 1]} : vector<2x64xf32> to vector<2x32xf32>
    %147 = vector.extract_strided_slice %135 {offsets = [0, 64], sizes = [2, 32], strides = [1, 1]} : vector<2x96xf32> to vector<2x32xf32>
    %148 = vector.extract_strided_slice %136 {offsets = [0, 64], sizes = [2, 32], strides = [1, 1]} : vector<2x96xf32> to vector<2x32xf32>
    %149 = arith.addf %148, %13 : vector<2x32xf32>
    %150 = arith.mulf %145, %149 : vector<2x32xf32>
    %151 = arith.addf %147, %150 : vector<2x32xf32>
    %152 = math.tanh %151 : vector<2x32xf32>
    %cst_37 = arith.constant 1.000000e+00 : f32
    %153 = vector.broadcast %cst_37 : f32 to vector<2x32xf32>
    %154 = arith.subf %153, %146 : vector<2x32xf32>
    %155 = arith.mulf %154, %152 : vector<2x32xf32>
    %156 = arith.mulf %146, %133 : vector<2x32xf32>
    %157 = arith.addf %155, %156 : vector<2x32xf32>
    %c10 = arith.constant 10 : index
    %c0_38 = arith.constant 0 : index
    %158 = vector.load %arg8[%c10, %c0_38] : memref<16x32xf32, #tpu.memory_space<vmem>>, vector<2x32xf32>
    tpu.vector_store %arg8[%c10, %c0_38], %157 {strides = array<i32>} : memref<16x32xf32, #tpu.memory_space<vmem>>, vector<2x32xf32>,
    %159 = vector.extract_strided_slice %7 {offsets = [12, 0], sizes = [2, 96], strides = [1, 1]} : vector<16x96xf32> to vector<2x96xf32>
    %cst_39 = arith.constant dense<0.000000e+00> : vector<2x96xf32>
    %160 = tpu.matmul %157, %9, %cst_39 {dimension_numbers = #tpu.dot_dimension_numbers<[1], [0], [0], [1], [0, 0, 1, 1], [], []>} : vector<2x32xf32>, vector<32x96xf32>, vector<2x96xf32> -> vector<2x96xf32>
    %161 = vector.extract_strided_slice %159 {offsets = [0, 0], sizes = [2, 64], strides = [1, 1]} : vector<2x96xf32> to vector<2x64xf32>
    %162 = vector.extract_strided_slice %160 {offsets = [0, 0], sizes = [2, 64], strides = [1, 1]} : vector<2x96xf32> to vector<2x64xf32>
    %163 = arith.addf %161, %162 : vector<2x64xf32>
    %164 = arith.negf %163 : vector<2x64xf32>
    %165 = math.exp %164 : vector<2x64xf32>
    %cst_40 = arith.constant 1.000000e+00 : f32
    %166 = vector.broadcast %cst_40 : f32 to vector<2x64xf32>
    %167 = arith.addf %166, %165 : vector<2x64xf32>
    %168 = arith.divf %166, %167 : vector<2x64xf32>
    %169 = vector.extract_strided_slice %168 {offsets = [0, 0], sizes = [2, 32], strides = [1, 1]} : vector<2x64xf32> to vector<2x32xf32>
    %170 = vector.extract_strided_slice %168 {offsets = [0, 32], sizes = [2, 32], strides = [1, 1]} : vector<2x64xf32> to vector<2x32xf32>
    %171 = vector.extract_strided_slice %159 {offsets = [0, 64], sizes = [2, 32], strides = [1, 1]} : vector<2x96xf32> to vector<2x32xf32>
    %172 = vector.extract_strided_slice %160 {offsets = [0, 64], sizes = [2, 32], strides = [1, 1]} : vector<2x96xf32> to vector<2x32xf32>
    %173 = arith.addf %172, %13 : vector<2x32xf32>
    %174 = arith.mulf %169, %173 : vector<2x32xf32>
    %175 = arith.addf %171, %174 : vector<2x32xf32>
    %176 = math.tanh %175 : vector<2x32xf32>
    %cst_41 = arith.constant 1.000000e+00 : f32
    %177 = vector.broadcast %cst_41 : f32 to vector<2x32xf32>
    %178 = arith.subf %177, %170 : vector<2x32xf32>
    %179 = arith.mulf %178, %176 : vector<2x32xf32>
    %180 = arith.mulf %170, %157 : vector<2x32xf32>
    %181 = arith.addf %179, %180 : vector<2x32xf32>
    %c12 = arith.constant 12 : index
    %c0_42 = arith.constant 0 : index
    %182 = vector.load %arg8[%c12, %c0_42] : memref<16x32xf32, #tpu.memory_space<vmem>>, vector<2x32xf32>
    tpu.vector_store %arg8[%c12, %c0_42], %181 {strides = array<i32>} : memref<16x32xf32, #tpu.memory_space<vmem>>, vector<2x32xf32>,
    %183 = vector.extract_strided_slice %7 {offsets = [14, 0], sizes = [2, 96], strides = [1, 1]} : vector<16x96xf32> to vector<2x96xf32>
    %cst_43 = arith.constant dense<0.000000e+00> : vector<2x96xf32>
    %184 = tpu.matmul %181, %9, %cst_43 {dimension_numbers = #tpu.dot_dimension_numbers<[1], [0], [0], [1], [0, 0, 1, 1], [], []>} : vector<2x32xf32>, vector<32x96xf32>, vector<2x96xf32> -> vector<2x96xf32>
    %185 = vector.extract_strided_slice %183 {offsets = [0, 0], sizes = [2, 64], strides = [1, 1]} : vector<2x96xf32> to vector<2x64xf32>
    %186 = vector.extract_strided_slice %184 {offsets = [0, 0], sizes = [2, 64], strides = [1, 1]} : vector<2x96xf32> to vector<2x64xf32>
    %187 = arith.addf %185, %186 : vector<2x64xf32>
    %188 = arith.negf %187 : vector<2x64xf32>
    %189 = math.exp %188 : vector<2x64xf32>
    %cst_44 = arith.constant 1.000000e+00 : f32
    %190 = vector.broadcast %cst_44 : f32 to vector<2x64xf32>
    %191 = arith.addf %190, %189 : vector<2x64xf32>
    %192 = arith.divf %190, %191 : vector<2x64xf32>
    %193 = vector.extract_strided_slice %192 {offsets = [0, 0], sizes = [2, 32], strides = [1, 1]} : vector<2x64xf32> to vector<2x32xf32>
    %194 = vector.extract_strided_slice %192 {offsets = [0, 32], sizes = [2, 32], strides = [1, 1]} : vector<2x64xf32> to vector<2x32xf32>
    %195 = vector.extract_strided_slice %183 {offsets = [0, 64], sizes = [2, 32], strides = [1, 1]} : vector<2x96xf32> to vector<2x32xf32>
    %196 = vector.extract_strided_slice %184 {offsets = [0, 64], sizes = [2, 32], strides = [1, 1]} : vector<2x96xf32> to vector<2x32xf32>
    %197 = arith.addf %196, %13 : vector<2x32xf32>
    %198 = arith.mulf %193, %197 : vector<2x32xf32>
    %199 = arith.addf %195, %198 : vector<2x32xf32>
    %200 = math.tanh %199 : vector<2x32xf32>
    %cst_45 = arith.constant 1.000000e+00 : f32
    %201 = vector.broadcast %cst_45 : f32 to vector<2x32xf32>
    %202 = arith.subf %201, %194 : vector<2x32xf32>
    %203 = arith.mulf %202, %200 : vector<2x32xf32>
    %204 = arith.mulf %194, %181 : vector<2x32xf32>
    %205 = arith.addf %203, %204 : vector<2x32xf32>
    %c14 = arith.constant 14 : index
    %c0_46 = arith.constant 0 : index
    %206 = vector.load %arg8[%c14, %c0_46] : memref<16x32xf32, #tpu.memory_space<vmem>>, vector<2x32xf32>
    tpu.vector_store %arg8[%c14, %c0_46], %205 {strides = array<i32>} : memref<16x32xf32, #tpu.memory_space<vmem>>, vector<2x32xf32>,
    %c0_47 = arith.constant 0 : index
    %c0_48 = arith.constant 0 : index
    %207 = vector.load %arg8[%c0_47, %c0_48] : memref<16x32xf32, #tpu.memory_space<vmem>>, vector<16x32xf32>
    %c1 = arith.constant 1 : index
    %c0_49 = arith.constant 0 : index
    %c0_50 = arith.constant 0 : index
    %208 = vector.load %arg1[%c1, %c0_49, %c0_50] : memref<2x32x96xf32, #tpu.memory_space<vmem>>, vector<1x32x96xf32>
    %209 = vector.shape_cast %208 : vector<1x32x96xf32> to vector<32x96xf32>
    %cst_51 = arith.constant dense<0.000000e+00> : vector<16x96xf32>
    %210 = tpu.matmul %207, %209, %cst_51 {dimension_numbers = #tpu.dot_dimension_numbers<[1], [0], [0], [1], [0, 0, 1, 1], [], []>} : vector<16x32xf32>, vector<32x96xf32>, vector<16x96xf32> -> vector<16x96xf32>
    %c1_52 = arith.constant 1 : index
    %c0_53 = arith.constant 0 : index
    %c0_54 = arith.constant 0 : index
    %211 = vector.load %arg3[%c1_52, %c0_53, %c0_54] : memref<2x1x96xf32, #tpu.memory_space<vmem>>, vector<1x1x96xf32>
    %212 = vector.shape_cast %211 : vector<1x1x96xf32> to vector<1x96xf32>
    %213 = vector.broadcast %212 : vector<1x96xf32> to vector<16x96xf32>
    %214 = arith.addf %210, %213 : vector<16x96xf32>
    %c1_55 = arith.constant 1 : index
    %c0_56 = arith.constant 0 : index
    %c0_57 = arith.constant 0 : index
    %215 = vector.load %arg2[%c1_55, %c0_56, %c0_57] : memref<2x32x96xf32, #tpu.memory_space<vmem>>, vector<1x32x96xf32>
    %216 = vector.shape_cast %215 : vector<1x32x96xf32> to vector<32x96xf32>
    %c1_58 = arith.constant 1 : index
    %c0_59 = arith.constant 0 : index
    %c0_60 = arith.constant 0 : index
    %217 = vector.load %arg4[%c1_58, %c0_59, %c0_60] : memref<2x1x32xf32, #tpu.memory_space<vmem>>, vector<1x1x32xf32>
    %218 = vector.shape_cast %217 : vector<1x1x32xf32> to vector<1x32xf32>
    %219 = vector.shape_cast %218 : vector<1x32xf32> to vector<1x32xf32>
    %220 = vector.broadcast %219 : vector<1x32xf32> to vector<2x32xf32>
    %cst_61 = arith.constant 0.000000e+00 : f32
    %221 = vector.broadcast %cst_61 : f32 to vector<2x32xf32>
    %222 = vector.extract_strided_slice %214 {offsets = [0, 0], sizes = [2, 96], strides = [1, 1]} : vector<16x96xf32> to vector<2x96xf32>
    %cst_62 = arith.constant dense<0.000000e+00> : vector<2x96xf32>
    %223 = tpu.matmul %221, %216, %cst_62 {dimension_numbers = #tpu.dot_dimension_numbers<[1], [0], [0], [1], [0, 0, 1, 1], [], []>} : vector<2x32xf32>, vector<32x96xf32>, vector<2x96xf32> -> vector<2x96xf32>
    %224 = vector.extract_strided_slice %222 {offsets = [0, 0], sizes = [2, 64], strides = [1, 1]} : vector<2x96xf32> to vector<2x64xf32>
    %225 = vector.extract_strided_slice %223 {offsets = [0, 0], sizes = [2, 64], strides = [1, 1]} : vector<2x96xf32> to vector<2x64xf32>
    %226 = arith.addf %224, %225 : vector<2x64xf32>
    %227 = arith.negf %226 : vector<2x64xf32>
    %228 = math.exp %227 : vector<2x64xf32>
    %cst_63 = arith.constant 1.000000e+00 : f32
    %229 = vector.broadcast %cst_63 : f32 to vector<2x64xf32>
    %230 = arith.addf %229, %228 : vector<2x64xf32>
    %231 = arith.divf %229, %230 : vector<2x64xf32>
    %232 = vector.extract_strided_slice %231 {offsets = [0, 0], sizes = [2, 32], strides = [1, 1]} : vector<2x64xf32> to vector<2x32xf32>
    %233 = vector.extract_strided_slice %231 {offsets = [0, 32], sizes = [2, 32], strides = [1, 1]} : vector<2x64xf32> to vector<2x32xf32>
    %234 = vector.extract_strided_slice %222 {offsets = [0, 64], sizes = [2, 32], strides = [1, 1]} : vector<2x96xf32> to vector<2x32xf32>
    %235 = vector.extract_strided_slice %223 {offsets = [0, 64], sizes = [2, 32], strides = [1, 1]} : vector<2x96xf32> to vector<2x32xf32>
    %236 = arith.addf %235, %220 : vector<2x32xf32>
    %237 = arith.mulf %232, %236 : vector<2x32xf32>
    %238 = arith.addf %234, %237 : vector<2x32xf32>
    %239 = math.tanh %238 : vector<2x32xf32>
    %cst_64 = arith.constant 1.000000e+00 : f32
    %240 = vector.broadcast %cst_64 : f32 to vector<2x32xf32>
    %241 = arith.subf %240, %233 : vector<2x32xf32>
    %242 = arith.mulf %241, %239 : vector<2x32xf32>
    %243 = arith.mulf %233, %221 : vector<2x32xf32>
    %244 = arith.addf %242, %243 : vector<2x32xf32>
    %c0_65 = arith.constant 0 : index
    %c0_66 = arith.constant 0 : index
    %245 = vector.load %arg8[%c0_65, %c0_66] : memref<16x32xf32, #tpu.memory_space<vmem>>, vector<2x32xf32>
    tpu.vector_store %arg8[%c0_65, %c0_66], %244 {strides = array<i32>} : memref<16x32xf32, #tpu.memory_space<vmem>>, vector<2x32xf32>,
    %246 = vector.extract_strided_slice %214 {offsets = [2, 0], sizes = [2, 96], strides = [1, 1]} : vector<16x96xf32> to vector<2x96xf32>
    %cst_67 = arith.constant dense<0.000000e+00> : vector<2x96xf32>
    %247 = tpu.matmul %244, %216, %cst_67 {dimension_numbers = #tpu.dot_dimension_numbers<[1], [0], [0], [1], [0, 0, 1, 1], [], []>} : vector<2x32xf32>, vector<32x96xf32>, vector<2x96xf32> -> vector<2x96xf32>
    %248 = vector.extract_strided_slice %246 {offsets = [0, 0], sizes = [2, 64], strides = [1, 1]} : vector<2x96xf32> to vector<2x64xf32>
    %249 = vector.extract_strided_slice %247 {offsets = [0, 0], sizes = [2, 64], strides = [1, 1]} : vector<2x96xf32> to vector<2x64xf32>
    %250 = arith.addf %248, %249 : vector<2x64xf32>
    %251 = arith.negf %250 : vector<2x64xf32>
    %252 = math.exp %251 : vector<2x64xf32>
    %cst_68 = arith.constant 1.000000e+00 : f32
    %253 = vector.broadcast %cst_68 : f32 to vector<2x64xf32>
    %254 = arith.addf %253, %252 : vector<2x64xf32>
    %255 = arith.divf %253, %254 : vector<2x64xf32>
    %256 = vector.extract_strided_slice %255 {offsets = [0, 0], sizes = [2, 32], strides = [1, 1]} : vector<2x64xf32> to vector<2x32xf32>
    %257 = vector.extract_strided_slice %255 {offsets = [0, 32], sizes = [2, 32], strides = [1, 1]} : vector<2x64xf32> to vector<2x32xf32>
    %258 = vector.extract_strided_slice %246 {offsets = [0, 64], sizes = [2, 32], strides = [1, 1]} : vector<2x96xf32> to vector<2x32xf32>
    %259 = vector.extract_strided_slice %247 {offsets = [0, 64], sizes = [2, 32], strides = [1, 1]} : vector<2x96xf32> to vector<2x32xf32>
    %260 = arith.addf %259, %220 : vector<2x32xf32>
    %261 = arith.mulf %256, %260 : vector<2x32xf32>
    %262 = arith.addf %258, %261 : vector<2x32xf32>
    %263 = math.tanh %262 : vector<2x32xf32>
    %cst_69 = arith.constant 1.000000e+00 : f32
    %264 = vector.broadcast %cst_69 : f32 to vector<2x32xf32>
    %265 = arith.subf %264, %257 : vector<2x32xf32>
    %266 = arith.mulf %265, %263 : vector<2x32xf32>
    %267 = arith.mulf %257, %244 : vector<2x32xf32>
    %268 = arith.addf %266, %267 : vector<2x32xf32>
    %c2_70 = arith.constant 2 : index
    %c0_71 = arith.constant 0 : index
    %269 = vector.load %arg8[%c2_70, %c0_71] : memref<16x32xf32, #tpu.memory_space<vmem>>, vector<2x32xf32>
    tpu.vector_store %arg8[%c2_70, %c0_71], %268 {strides = array<i32>} : memref<16x32xf32, #tpu.memory_space<vmem>>, vector<2x32xf32>,
    %270 = vector.extract_strided_slice %214 {offsets = [4, 0], sizes = [2, 96], strides = [1, 1]} : vector<16x96xf32> to vector<2x96xf32>
    %cst_72 = arith.constant dense<0.000000e+00> : vector<2x96xf32>
    %271 = tpu.matmul %268, %216, %cst_72 {dimension_numbers = #tpu.dot_dimension_numbers<[1], [0], [0], [1], [0, 0, 1, 1], [], []>} : vector<2x32xf32>, vector<32x96xf32>, vector<2x96xf32> -> vector<2x96xf32>
    %272 = vector.extract_strided_slice %270 {offsets = [0, 0], sizes = [2, 64], strides = [1, 1]} : vector<2x96xf32> to vector<2x64xf32>
    %273 = vector.extract_strided_slice %271 {offsets = [0, 0], sizes = [2, 64], strides = [1, 1]} : vector<2x96xf32> to vector<2x64xf32>
    %274 = arith.addf %272, %273 : vector<2x64xf32>
    %275 = arith.negf %274 : vector<2x64xf32>
    %276 = math.exp %275 : vector<2x64xf32>
    %cst_73 = arith.constant 1.000000e+00 : f32
    %277 = vector.broadcast %cst_73 : f32 to vector<2x64xf32>
    %278 = arith.addf %277, %276 : vector<2x64xf32>
    %279 = arith.divf %277, %278 : vector<2x64xf32>
    %280 = vector.extract_strided_slice %279 {offsets = [0, 0], sizes = [2, 32], strides = [1, 1]} : vector<2x64xf32> to vector<2x32xf32>
    %281 = vector.extract_strided_slice %279 {offsets = [0, 32], sizes = [2, 32], strides = [1, 1]} : vector<2x64xf32> to vector<2x32xf32>
    %282 = vector.extract_strided_slice %270 {offsets = [0, 64], sizes = [2, 32], strides = [1, 1]} : vector<2x96xf32> to vector<2x32xf32>
    %283 = vector.extract_strided_slice %271 {offsets = [0, 64], sizes = [2, 32], strides = [1, 1]} : vector<2x96xf32> to vector<2x32xf32>
    %284 = arith.addf %283, %220 : vector<2x32xf32>
    %285 = arith.mulf %280, %284 : vector<2x32xf32>
    %286 = arith.addf %282, %285 : vector<2x32xf32>
    %287 = math.tanh %286 : vector<2x32xf32>
    %cst_74 = arith.constant 1.000000e+00 : f32
    %288 = vector.broadcast %cst_74 : f32 to vector<2x32xf32>
    %289 = arith.subf %288, %281 : vector<2x32xf32>
    %290 = arith.mulf %289, %287 : vector<2x32xf32>
    %291 = arith.mulf %281, %268 : vector<2x32xf32>
    %292 = arith.addf %290, %291 : vector<2x32xf32>
    %c4_75 = arith.constant 4 : index
    %c0_76 = arith.constant 0 : index
    %293 = vector.load %arg8[%c4_75, %c0_76] : memref<16x32xf32, #tpu.memory_space<vmem>>, vector<2x32xf32>
    tpu.vector_store %arg8[%c4_75, %c0_76], %292 {strides = array<i32>} : memref<16x32xf32, #tpu.memory_space<vmem>>, vector<2x32xf32>,
    %294 = vector.extract_strided_slice %214 {offsets = [6, 0], sizes = [2, 96], strides = [1, 1]} : vector<16x96xf32> to vector<2x96xf32>
    %cst_77 = arith.constant dense<0.000000e+00> : vector<2x96xf32>
    %295 = tpu.matmul %292, %216, %cst_77 {dimension_numbers = #tpu.dot_dimension_numbers<[1], [0], [0], [1], [0, 0, 1, 1], [], []>} : vector<2x32xf32>, vector<32x96xf32>, vector<2x96xf32> -> vector<2x96xf32>
    %296 = vector.extract_strided_slice %294 {offsets = [0, 0], sizes = [2, 64], strides = [1, 1]} : vector<2x96xf32> to vector<2x64xf32>
    %297 = vector.extract_strided_slice %295 {offsets = [0, 0], sizes = [2, 64], strides = [1, 1]} : vector<2x96xf32> to vector<2x64xf32>
    %298 = arith.addf %296, %297 : vector<2x64xf32>
    %299 = arith.negf %298 : vector<2x64xf32>
    %300 = math.exp %299 : vector<2x64xf32>
    %cst_78 = arith.constant 1.000000e+00 : f32
    %301 = vector.broadcast %cst_78 : f32 to vector<2x64xf32>
    %302 = arith.addf %301, %300 : vector<2x64xf32>
    %303 = arith.divf %301, %302 : vector<2x64xf32>
    %304 = vector.extract_strided_slice %303 {offsets = [0, 0], sizes = [2, 32], strides = [1, 1]} : vector<2x64xf32> to vector<2x32xf32>
    %305 = vector.extract_strided_slice %303 {offsets = [0, 32], sizes = [2, 32], strides = [1, 1]} : vector<2x64xf32> to vector<2x32xf32>
    %306 = vector.extract_strided_slice %294 {offsets = [0, 64], sizes = [2, 32], strides = [1, 1]} : vector<2x96xf32> to vector<2x32xf32>
    %307 = vector.extract_strided_slice %295 {offsets = [0, 64], sizes = [2, 32], strides = [1, 1]} : vector<2x96xf32> to vector<2x32xf32>
    %308 = arith.addf %307, %220 : vector<2x32xf32>
    %309 = arith.mulf %304, %308 : vector<2x32xf32>
    %310 = arith.addf %306, %309 : vector<2x32xf32>
    %311 = math.tanh %310 : vector<2x32xf32>
    %cst_79 = arith.constant 1.000000e+00 : f32
    %312 = vector.broadcast %cst_79 : f32 to vector<2x32xf32>
    %313 = arith.subf %312, %305 : vector<2x32xf32>
    %314 = arith.mulf %313, %311 : vector<2x32xf32>
    %315 = arith.mulf %305, %292 : vector<2x32xf32>
    %316 = arith.addf %314, %315 : vector<2x32xf32>
    %c6_80 = arith.constant 6 : index
    %c0_81 = arith.constant 0 : index
    %317 = vector.load %arg8[%c6_80, %c0_81] : memref<16x32xf32, #tpu.memory_space<vmem>>, vector<2x32xf32>
    tpu.vector_store %arg8[%c6_80, %c0_81], %316 {strides = array<i32>} : memref<16x32xf32, #tpu.memory_space<vmem>>, vector<2x32xf32>,
    %318 = vector.extract_strided_slice %214 {offsets = [8, 0], sizes = [2, 96], strides = [1, 1]} : vector<16x96xf32> to vector<2x96xf32>
    %cst_82 = arith.constant dense<0.000000e+00> : vector<2x96xf32>
    %319 = tpu.matmul %316, %216, %cst_82 {dimension_numbers = #tpu.dot_dimension_numbers<[1], [0], [0], [1], [0, 0, 1, 1], [], []>} : vector<2x32xf32>, vector<32x96xf32>, vector<2x96xf32> -> vector<2x96xf32>
    %320 = vector.extract_strided_slice %318 {offsets = [0, 0], sizes = [2, 64], strides = [1, 1]} : vector<2x96xf32> to vector<2x64xf32>
    %321 = vector.extract_strided_slice %319 {offsets = [0, 0], sizes = [2, 64], strides = [1, 1]} : vector<2x96xf32> to vector<2x64xf32>
    %322 = arith.addf %320, %321 : vector<2x64xf32>
    %323 = arith.negf %322 : vector<2x64xf32>
    %324 = math.exp %323 : vector<2x64xf32>
    %cst_83 = arith.constant 1.000000e+00 : f32
    %325 = vector.broadcast %cst_83 : f32 to vector<2x64xf32>
    %326 = arith.addf %325, %324 : vector<2x64xf32>
    %327 = arith.divf %325, %326 : vector<2x64xf32>
    %328 = vector.extract_strided_slice %327 {offsets = [0, 0], sizes = [2, 32], strides = [1, 1]} : vector<2x64xf32> to vector<2x32xf32>
    %329 = vector.extract_strided_slice %327 {offsets = [0, 32], sizes = [2, 32], strides = [1, 1]} : vector<2x64xf32> to vector<2x32xf32>
    %330 = vector.extract_strided_slice %318 {offsets = [0, 64], sizes = [2, 32], strides = [1, 1]} : vector<2x96xf32> to vector<2x32xf32>
    %331 = vector.extract_strided_slice %319 {offsets = [0, 64], sizes = [2, 32], strides = [1, 1]} : vector<2x96xf32> to vector<2x32xf32>
    %332 = arith.addf %331, %220 : vector<2x32xf32>
    %333 = arith.mulf %328, %332 : vector<2x32xf32>
    %334 = arith.addf %330, %333 : vector<2x32xf32>
    %335 = math.tanh %334 : vector<2x32xf32>
    %cst_84 = arith.constant 1.000000e+00 : f32
    %336 = vector.broadcast %cst_84 : f32 to vector<2x32xf32>
    %337 = arith.subf %336, %329 : vector<2x32xf32>
    %338 = arith.mulf %337, %335 : vector<2x32xf32>
    %339 = arith.mulf %329, %316 : vector<2x32xf32>
    %340 = arith.addf %338, %339 : vector<2x32xf32>
    %c8_85 = arith.constant 8 : index
    %c0_86 = arith.constant 0 : index
    %341 = vector.load %arg8[%c8_85, %c0_86] : memref<16x32xf32, #tpu.memory_space<vmem>>, vector<2x32xf32>
    tpu.vector_store %arg8[%c8_85, %c0_86], %340 {strides = array<i32>} : memref<16x32xf32, #tpu.memory_space<vmem>>, vector<2x32xf32>,
    %342 = vector.extract_strided_slice %214 {offsets = [10, 0], sizes = [2, 96], strides = [1, 1]} : vector<16x96xf32> to vector<2x96xf32>
    %cst_87 = arith.constant dense<0.000000e+00> : vector<2x96xf32>
    %343 = tpu.matmul %340, %216, %cst_87 {dimension_numbers = #tpu.dot_dimension_numbers<[1], [0], [0], [1], [0, 0, 1, 1], [], []>} : vector<2x32xf32>, vector<32x96xf32>, vector<2x96xf32> -> vector<2x96xf32>
    %344 = vector.extract_strided_slice %342 {offsets = [0, 0], sizes = [2, 64], strides = [1, 1]} : vector<2x96xf32> to vector<2x64xf32>
    %345 = vector.extract_strided_slice %343 {offsets = [0, 0], sizes = [2, 64], strides = [1, 1]} : vector<2x96xf32> to vector<2x64xf32>
    %346 = arith.addf %344, %345 : vector<2x64xf32>
    %347 = arith.negf %346 : vector<2x64xf32>
    %348 = math.exp %347 : vector<2x64xf32>
    %cst_88 = arith.constant 1.000000e+00 : f32
    %349 = vector.broadcast %cst_88 : f32 to vector<2x64xf32>
    %350 = arith.addf %349, %348 : vector<2x64xf32>
    %351 = arith.divf %349, %350 : vector<2x64xf32>
    %352 = vector.extract_strided_slice %351 {offsets = [0, 0], sizes = [2, 32], strides = [1, 1]} : vector<2x64xf32> to vector<2x32xf32>
    %353 = vector.extract_strided_slice %351 {offsets = [0, 32], sizes = [2, 32], strides = [1, 1]} : vector<2x64xf32> to vector<2x32xf32>
    %354 = vector.extract_strided_slice %342 {offsets = [0, 64], sizes = [2, 32], strides = [1, 1]} : vector<2x96xf32> to vector<2x32xf32>
    %355 = vector.extract_strided_slice %343 {offsets = [0, 64], sizes = [2, 32], strides = [1, 1]} : vector<2x96xf32> to vector<2x32xf32>
    %356 = arith.addf %355, %220 : vector<2x32xf32>
    %357 = arith.mulf %352, %356 : vector<2x32xf32>
    %358 = arith.addf %354, %357 : vector<2x32xf32>
    %359 = math.tanh %358 : vector<2x32xf32>
    %cst_89 = arith.constant 1.000000e+00 : f32
    %360 = vector.broadcast %cst_89 : f32 to vector<2x32xf32>
    %361 = arith.subf %360, %353 : vector<2x32xf32>
    %362 = arith.mulf %361, %359 : vector<2x32xf32>
    %363 = arith.mulf %353, %340 : vector<2x32xf32>
    %364 = arith.addf %362, %363 : vector<2x32xf32>
    %c10_90 = arith.constant 10 : index
    %c0_91 = arith.constant 0 : index
    %365 = vector.load %arg8[%c10_90, %c0_91] : memref<16x32xf32, #tpu.memory_space<vmem>>, vector<2x32xf32>
    tpu.vector_store %arg8[%c10_90, %c0_91], %364 {strides = array<i32>} : memref<16x32xf32, #tpu.memory_space<vmem>>, vector<2x32xf32>,
    %366 = vector.extract_strided_slice %214 {offsets = [12, 0], sizes = [2, 96], strides = [1, 1]} : vector<16x96xf32> to vector<2x96xf32>
    %cst_92 = arith.constant dense<0.000000e+00> : vector<2x96xf32>
    %367 = tpu.matmul %364, %216, %cst_92 {dimension_numbers = #tpu.dot_dimension_numbers<[1], [0], [0], [1], [0, 0, 1, 1], [], []>} : vector<2x32xf32>, vector<32x96xf32>, vector<2x96xf32> -> vector<2x96xf32>
    %368 = vector.extract_strided_slice %366 {offsets = [0, 0], sizes = [2, 64], strides = [1, 1]} : vector<2x96xf32> to vector<2x64xf32>
    %369 = vector.extract_strided_slice %367 {offsets = [0, 0], sizes = [2, 64], strides = [1, 1]} : vector<2x96xf32> to vector<2x64xf32>
    %370 = arith.addf %368, %369 : vector<2x64xf32>
    %371 = arith.negf %370 : vector<2x64xf32>
    %372 = math.exp %371 : vector<2x64xf32>
    %cst_93 = arith.constant 1.000000e+00 : f32
    %373 = vector.broadcast %cst_93 : f32 to vector<2x64xf32>
    %374 = arith.addf %373, %372 : vector<2x64xf32>
    %375 = arith.divf %373, %374 : vector<2x64xf32>
    %376 = vector.extract_strided_slice %375 {offsets = [0, 0], sizes = [2, 32], strides = [1, 1]} : vector<2x64xf32> to vector<2x32xf32>
    %377 = vector.extract_strided_slice %375 {offsets = [0, 32], sizes = [2, 32], strides = [1, 1]} : vector<2x64xf32> to vector<2x32xf32>
    %378 = vector.extract_strided_slice %366 {offsets = [0, 64], sizes = [2, 32], strides = [1, 1]} : vector<2x96xf32> to vector<2x32xf32>
    %379 = vector.extract_strided_slice %367 {offsets = [0, 64], sizes = [2, 32], strides = [1, 1]} : vector<2x96xf32> to vector<2x32xf32>
    %380 = arith.addf %379, %220 : vector<2x32xf32>
    %381 = arith.mulf %376, %380 : vector<2x32xf32>
    %382 = arith.addf %378, %381 : vector<2x32xf32>
    %383 = math.tanh %382 : vector<2x32xf32>
    %cst_94 = arith.constant 1.000000e+00 : f32
    %384 = vector.broadcast %cst_94 : f32 to vector<2x32xf32>
    %385 = arith.subf %384, %377 : vector<2x32xf32>
    %386 = arith.mulf %385, %383 : vector<2x32xf32>
    %387 = arith.mulf %377, %364 : vector<2x32xf32>
    %388 = arith.addf %386, %387 : vector<2x32xf32>
    %c12_95 = arith.constant 12 : index
    %c0_96 = arith.constant 0 : index
    %389 = vector.load %arg8[%c12_95, %c0_96] : memref<16x32xf32, #tpu.memory_space<vmem>>, vector<2x32xf32>
    tpu.vector_store %arg8[%c12_95, %c0_96], %388 {strides = array<i32>} : memref<16x32xf32, #tpu.memory_space<vmem>>, vector<2x32xf32>,
    %390 = vector.extract_strided_slice %214 {offsets = [14, 0], sizes = [2, 96], strides = [1, 1]} : vector<16x96xf32> to vector<2x96xf32>
    %cst_97 = arith.constant dense<0.000000e+00> : vector<2x96xf32>
    %391 = tpu.matmul %388, %216, %cst_97 {dimension_numbers = #tpu.dot_dimension_numbers<[1], [0], [0], [1], [0, 0, 1, 1], [], []>} : vector<2x32xf32>, vector<32x96xf32>, vector<2x96xf32> -> vector<2x96xf32>
    %392 = vector.extract_strided_slice %390 {offsets = [0, 0], sizes = [2, 64], strides = [1, 1]} : vector<2x96xf32> to vector<2x64xf32>
    %393 = vector.extract_strided_slice %391 {offsets = [0, 0], sizes = [2, 64], strides = [1, 1]} : vector<2x96xf32> to vector<2x64xf32>
    %394 = arith.addf %392, %393 : vector<2x64xf32>
    %395 = arith.negf %394 : vector<2x64xf32>
    %396 = math.exp %395 : vector<2x64xf32>
    %cst_98 = arith.constant 1.000000e+00 : f32
    %397 = vector.broadcast %cst_98 : f32 to vector<2x64xf32>
    %398 = arith.addf %397, %396 : vector<2x64xf32>
    %399 = arith.divf %397, %398 : vector<2x64xf32>
    %400 = vector.extract_strided_slice %399 {offsets = [0, 0], sizes = [2, 32], strides = [1, 1]} : vector<2x64xf32> to vector<2x32xf32>
    %401 = vector.extract_strided_slice %399 {offsets = [0, 32], sizes = [2, 32], strides = [1, 1]} : vector<2x64xf32> to vector<2x32xf32>
    %402 = vector.extract_strided_slice %390 {offsets = [0, 64], sizes = [2, 32], strides = [1, 1]} : vector<2x96xf32> to vector<2x32xf32>
    %403 = vector.extract_strided_slice %391 {offsets = [0, 64], sizes = [2, 32], strides = [1, 1]} : vector<2x96xf32> to vector<2x32xf32>
    %404 = arith.addf %403, %220 : vector<2x32xf32>
    %405 = arith.mulf %400, %404 : vector<2x32xf32>
    %406 = arith.addf %402, %405 : vector<2x32xf32>
    %407 = math.tanh %406 : vector<2x32xf32>
    %cst_99 = arith.constant 1.000000e+00 : f32
    %408 = vector.broadcast %cst_99 : f32 to vector<2x32xf32>
    %409 = arith.subf %408, %401 : vector<2x32xf32>
    %410 = arith.mulf %409, %407 : vector<2x32xf32>
    %411 = arith.mulf %401, %388 : vector<2x32xf32>
    %412 = arith.addf %410, %411 : vector<2x32xf32>
    %c14_100 = arith.constant 14 : index
    %c0_101 = arith.constant 0 : index
    %413 = vector.load %arg8[%c14_100, %c0_101] : memref<16x32xf32, #tpu.memory_space<vmem>>, vector<2x32xf32>
    tpu.vector_store %arg8[%c14_100, %c0_101], %412 {strides = array<i32>} : memref<16x32xf32, #tpu.memory_space<vmem>>, vector<2x32xf32>,
    %c0_102 = arith.constant 0 : index
    %c0_103 = arith.constant 0 : index
    %414 = vector.load %arg8[%c0_102, %c0_103] : memref<16x32xf32, #tpu.memory_space<vmem>>, vector<16x32xf32>
    %c0_104 = arith.constant 0 : index
    %c0_105 = arith.constant 0 : index
    %415 = vector.load %arg5[%c0_104, %c0_105] : memref<32x4xf32, #tpu.memory_space<vmem>>, vector<32x4xf32>
    %cst_106 = arith.constant dense<0.000000e+00> : vector<16x4xf32>
    %416 = tpu.matmul %414, %415, %cst_106 {dimension_numbers = #tpu.dot_dimension_numbers<[1], [0], [0], [1], [0, 0, 1, 1], [], []>} : vector<16x32xf32>, vector<32x4xf32>, vector<16x4xf32> -> vector<16x4xf32>
    %c0_107 = arith.constant 0 : index
    %c0_108 = arith.constant 0 : index
    %417 = vector.load %arg6[%c0_107, %c0_108] : memref<1x4xf32, #tpu.memory_space<vmem>>, vector<1x4xf32>
    %418 = vector.broadcast %417 : vector<1x4xf32> to vector<16x4xf32>
    %419 = arith.addf %416, %418 : vector<16x4xf32>
    %420 = arith.negf %419 : vector<16x4xf32>
    %421 = math.exp %420 : vector<16x4xf32>
    %cst_109 = arith.constant 1.000000e+00 : f32
    %422 = vector.broadcast %cst_109 : f32 to vector<16x4xf32>
    %423 = arith.addf %422, %421 : vector<16x4xf32>
    %424 = arith.divf %422, %423 : vector<16x4xf32>
    %c0_110 = arith.constant 0 : index
    %c0_111 = arith.constant 0 : index
    %425 = vector.load %arg7[%c0_110, %c0_111] : memref<16x4xf32, #tpu.memory_space<vmem>>, vector<16x4xf32>
    tpu.vector_store %arg7[%c0_110, %c0_111], %424 {strides = array<i32>} : memref<16x4xf32, #tpu.memory_space<vmem>>, vector<16x4xf32>,
    return
  }
}

</mosaic_0001>

<llo_original>
// kernel: recovery_forward.1
$region0: #{recovery_forward.1}
  #allocation0 [shape = 'u32[]', space=smem, size = 0x4, offset = 0x4, fixed_abs, tag = 'smem constant byte address 0x4 - core index']
  #allocation1 [shape = 'u32[144,128]{1,0:T(1,128)}', space=vmem, size = 0x12000, scoped, tag = 'internal scratch']
  #allocation2 [shape = 'f32[16,32]{1,0:T(8,128)}', space=vmem, size = 0x2000, scoped, tag = 'scratch operand']
  %s0 = inlined_call_operand.vmem [shape: f32[16,32], index: 0, kind: input, shape index: {}]
  %s1 = inlined_call_operand.vmem [shape: f32[2,32,96], index: 1, kind: input, shape index: {}]
  %s2 = inlined_call_operand.hbm [shape: f32[2,32,96], index: 2, kind: input, shape index: {}]
  %s3 = inlined_call_operand.vmem [shape: f32[2,1,96], index: 3, kind: input, shape index: {}]
  %s4 = inlined_call_operand.vmem [shape: f32[2,1,32], index: 4, kind: input, shape index: {}]
  %s5 = inlined_call_operand.vmem [shape: f32[32,4], index: 5, kind: input, shape index: {}]
  %s6 = inlined_call_operand.vmem [shape: f32[1,4], index: 6, kind: input, shape index: {}]
  %s7 = inlined_call_operand.vmem [shape: f32[16,4], index: 7, kind: output, shape index: {}]
  %s8 = sld [smem:[#allocation0]]
  $region42: #{recovery_forward.1} parent=0
    _
  %s10 = ssub.s32 1, %s8
  %s11 = scalar_select 0, %s10, %s8
  $region1: #{recovery_forward.1} parent=0
    #allocation3 [shape = 'u8[32768]{0}', space=vmem, size = 0x8000, scoped, tag = 'input window, operand 2, single buffered']
    #allocation4 [shape = 's32[1]{0}', space=sflag, size = 0x4, scoped, tag = 'scoped memory for recovery_forward.1']
    %12 = vsyncpa [#allocation4], 0
    // Predicated region
    $region2: #{recovery_forward.1} parent=1 // pred_check
      _
    $region3: #{recovery_forward.1} parent=1 // pred_check_branch
      %14 = sbr.rel (0) target = $region5
    $region4: #{recovery_forward.1} parent=1 // pred_region
      _
    $region5: #{recovery_forward.1} parent=1 // pred_fallthru
      _
    // Predicated region
    $region6: #{recovery_forward.1} parent=1 // pred_check
      _
    $region7: #{recovery_forward.1} parent=1 // pred_check_branch
      %16 = sbr.rel (0) target = $region9
    $region8: #{recovery_forward.1} parent=1 // pred_region
      _
    $region9: #{recovery_forward.1} parent=1 // pred_fallthru
      _
    // Predicated region
    $region10: #{recovery_forward.1} parent=1 // pred_check
      _
    $region11: #{recovery_forward.1} parent=1 // pred_check_branch
      %18 = sbr.rel (0) target = $region13
    $region12: #{recovery_forward.1} parent=1 // pred_region
      %s20 = ssub.s32 1024, 1024
      %21 = vsyncadd [#allocation4], %s20
      %s22 = sshll.u32 [#allocation3], 4
      %s23 = int_to_ptr.vmem [resolvable:$true] %s22
      %28 = dma.hbm_to_vmem [thread:$0]  %s2, 1024, %s23, [#allocation4], 128, 128, 8
    $region13: #{recovery_forward.1} parent=1 // pred_fallthru
      _
    // Predicated region
    $region14: #{recovery_forward.1} parent=1 // pred_check
      _
    $region15: #{recovery_forward.1} parent=1 // pred_check_branch
      %30 = sbr.rel (0) target = $region17
    $region16: #{recovery_forward.1} parent=1 // pred_region
      _
    $region17: #{recovery_forward.1} parent=1 // pred_fallthru
      _
    // Predicated region
    $region18: #{recovery_forward.1} parent=1 // pred_check
      _
    $region19: #{recovery_forward.1} parent=1 // pred_check_branch
      %32 = sbr.rel (0) target = $region21
    $region20: #{recovery_forward.1} parent=1 // pred_region
      _
    $region21: #{recovery_forward.1} parent=1 // pred_fallthru
      _
    // Predicated region
    $region22: #{recovery_forward.1} parent=1 // pred_check
      _
    $region23: #{recovery_forward.1} parent=1 // pred_check_branch
      %34 = sbr.rel (0) target = $region25
    $region24: #{recovery_forward.1} parent=1 // pred_region
      _
    $region25: #{recovery_forward.1} parent=1 // pred_fallthru
      _
    // Predicated region
    $region26: #{recovery_forward.1} parent=1 // pred_check
      _
    $region27: #{recovery_forward.1} parent=1 // pred_check_branch
      %36 = sbr.rel (0) target = $region29
    $region28: #{recovery_forward.1} parent=1 // pred_region
      _
    $region29: #{recovery_forward.1} parent=1 // pred_fallthru
      _
    // Predicated region
    $region30: #{recovery_forward.1} parent=1 // pred_check
      _
    $region31: #{recovery_forward.1} parent=1 // pred_check_branch
      %38 = sbr.rel (0) target = $region33
    $region32: #{recovery_forward.1} parent=1 // pred_region
      %39 = dma.done [#allocation4], 1024
    $region33: #{recovery_forward.1} parent=1 // pred_fallthru
      _
    %v40 = vld [vmem:[%s0] sm:$0xff]
    %v41 = vld [vmem:[%s0 + $0x8] sm:$0xff]
    %v42 = vld [vmem:[%s1] sm:$0xff]
    %v43 = vld [vmem:[%s1 + $0x8] sm:$0xff]
    %v44 = vld [vmem:[%s1 + $0x10] sm:$0xff]
    %v45 = vld [vmem:[%s1 + $0x18] sm:$0xff]
    %v46 = vld [vmem:[%s3] sm:$0x1]
    %v48 = vlaneseq
    %v49 = vshrl.u32 %v48, 7
    %v50 = vsub.s32 0, %v49
    %v51 = vrot.slane %v46, %v50
    %vm53 = vcmask 261120
    %v55 = vsel %vm53, %v40, 0
    %v58 = vsel %vm53, %v41, 0
    %60 = vmatprep.subr.mxu0 0.0
    %61 = vmatpush1.msra.mxu0 %v42
    %62 = vmatprep.subr.mxu0 0.0
    %63 = vmatpush1.msra.mxu0 %v43
    %64 = vmatprep.subr.mxu0 0.0
    %65 = vmatpush1.msra.mxu0 %v44
    %66 = vmatprep.subr.mxu0 0.0
    %67 = vmatpush1.msra.mxu0 %v45
    %68 = vmatprep.subr.mxu0 0.0
    %69 = vmatpush1.msra.mxu0 0.0
    %70 = vmatprep.subr.mxu0 0.0
    %71 = vmatpush1.msra.mxu0 0.0
    %72 = vmatprep.subr.mxu0 0.0
    %73 = vmatpush1.msra.mxu0 0.0
    %74 = vmatprep.subr.mxu0 0.0
    %75 = vmatpush1.msra.mxu0 0.0
    %76 = vmatprep.subr.mxu0 0.0
    %77 = vmatpush1.msra.mxu0 0.0
    %78 = vmatprep.subr.mxu0 0.0
    %79 = vmatpush1.msra.mxu0 0.0
    %80 = vmatprep.subr.mxu0 0.0
    %81 = vmatpush1.msra.mxu0 0.0
    %82 = vmatprep.subr.mxu0 0.0
    %83 = vmatpush1.msra.mxu0 0.0
    %84 = vmatprep.subr.mxu0 0.0
    %85 = vmatpush1.msra.mxu0 0.0
    %86 = vmatprep.subr.mxu0 0.0
    %87 = vmatpush1.msra.mxu0 0.0
    %88 = vmatprep.subr.mxu0 0.0
    %89 = vmatpush1.msra.mxu0 0.0
    %90 = vmatprep.subr.mxu0 0.0
    %91 = vmatpush1.msra.mxu0 0.0
    %92 = vmatprep.subr.mxu0 0.0
    %93 = vmatpush1.msra.mxu0 0.0
    %94 = vmatprep.subr.mxu0 0.0
    %95 = vmatpush1.msra.mxu0 0.0
    %96 = vmatprep.subr.mxu0 0.0
    %97 = vmatpush1.msra.mxu0 0.0
    %98 = vmatprep.subr.mxu0 0.0
    %99 = vmatpush1.msra.mxu0 0.0
    %100 = vmatprep.subr.mxu0 0.0
    %101 = vmatpush1.msra.mxu0 0.0
    %102 = vmatprep.subr.mxu0 0.0
    %103 = vmatpush1.msra.mxu0 0.0
    %104 = vmatprep.subr.mxu0 0.0
    %105 = vmatpush1.msra.mxu0 0.0
    %106 = vmatprep.subr.mxu0 0.0
    %107 = vmatpush1.msra.mxu0 0.0
    %108 = vmatprep.subr.mxu0 0.0
    %109 = vmatpush1.msra.mxu0 0.0
    %110 = vmatprep.subr.mxu0 0.0
    %111 = vmatpush1.msra.mxu0 0.0
    %112 = vmatprep.subr.mxu0 0.0
    %113 = vmatpush1.msra.mxu0 0.0
    %114 = vmatprep.subr.mxu0 0.0
    %115 = vmatpush1.msra.mxu0 0.0
    %116 = vmatprep.subr.mxu0 0.0
    %117 = vmatpush1.msra.mxu0 0.0
    %118 = vmatprep.subr.mxu0 0.0
    %119 = vmatpush1.msra.mxu0 0.0
    %120 = vmatprep.subr.mxu0 0.0
    %121 = vmatpush1.msra.mxu0 0.0
    %122 = vmatprep.subr.mxu0 0.0
    %123 = vmatpush1.msra.mxu0 0.0
    %124 = vmatprep.mubr.f32.mxu0 0.0
    %125 = vmatmul.mubr.f32.gmra.mrb[0].mxu0 %v55
    %v126 = vpop.f32.mrb[0].mxu0
    %v127 = vadd.f32 %v51, %v126
    %v128 = vpop.f32.mrb[0].mxu0
    %129 = vmatprep.mubr.f32.mxu0 0.0
    %130 = vmatmul.mubr.f32.gmra.mrb[0].mxu0 %v58
    %v131 = vpop.f32.mrb[0].mxu0
    %v132 = vadd.f32 %v51, %v131
    %v133 = vpop.f32.mrb[0].mxu0
    %134 = vdwg.mxu0
    %v135 = vld [vmem:[#allocation3] sm:$0xff]
    %v136 = vld [vmem:[#allocation3 + $0x8] sm:$0xff]
    %v137 = vld [vmem:[#allocation3 + $0x10] sm:$0xff]
    %v138 = vld [vmem:[#allocation3 + $0x18] sm:$0xff]
    %v139 = vld [vmem:[%s4] sm:$0x1]
    %v141 = vlaneseq
    %v142 = vshrl.u32 %v141, 7
    %v143 = vsub.s32 0, %v142
    %v144 = vrot.slane %v139, %v143
    %v146 = vsel %vm53, 0.0, 0
    %148 = vmatprep.subr.mxu0 0.0
    %149 = vmatpush1.msra.mxu0 %v135
    %150 = vmatprep.subr.mxu0 0.0
    %151 = vmatpush1.msra.mxu0 %v136
    %152 = vmatprep.subr.mxu0 0.0
    %153 = vmatpush1.msra.mxu0 %v137
    %154 = vmatprep.subr.mxu0 0.0
    %155 = vmatpush1.msra.mxu0 %v138
    %156 = vmatprep.subr.mxu0 0.0
    %157 = vmatpush1.msra.mxu0 0.0
    %158 = vmatprep.subr.mxu0 0.0
    %159 = vmatpush1.msra.mxu0 0.0
    %160 = vmatprep.subr.mxu0 0.0
    %161 = vmatpush1.msra.mxu0 0.0
    %162 = vmatprep.subr.mxu0 0.0
    %163 = vmatpush1.msra.mxu0 0.0
    %164 = vmatprep.subr.mxu0 0.0
    %165 = vmatpush1.msra.mxu0 0.0
    %166 = vmatprep.subr.mxu0 0.0
    %167 = vmatpush1.msra.mxu0 0.0
    %168 = vmatprep.subr.mxu0 0.0
    %169 = vmatpush1.msra.mxu0 0.0
    %170 = vmatprep.subr.mxu0 0.0
    %171 = vmatpush1.msra.mxu0 0.0
    %172 = vmatprep.subr.mxu0 0.0
    %173 = vmatpush1.msra.mxu0 0.0
    %174 = vmatprep.subr.mxu0 0.0
    %175 = vmatpush1.msra.mxu0 0.0
    %176 = vmatprep.subr.mxu0 0.0
    %177 = vmatpush1.msra.mxu0 0.0
    %178 = vmatprep.subr.mxu0 0.0
    %179 = vmatpush1.msra.mxu0 0.0
    %180 = vmatprep.subr.mxu0 0.0
    %181 = vmatpush1.msra.mxu0 0.0
    %182 = vmatprep.subr.mxu0 0.0
    %183 = vmatpush1.msra.mxu0 0.0
    %184 = vmatprep.subr.mxu0 0.0
    %185 = vmatpush1.msra.mxu0 0.0
    %186 = vmatprep.subr.mxu0 0.0
    %187 = vmatpush1.msra.mxu0 0.0
    %188 = vmatprep.subr.mxu0 0.0
    %189 = vmatpush1.msra.mxu0 0.0
    %190 = vmatprep.subr.mxu0 0.0
    %191 = vmatpush1.msra.mxu0 0.0
    %192 = vmatprep.subr.mxu0 0.0
    %193 = vmatpush1.msra.mxu0 0.0
    %194 = vmatprep.subr.mxu0 0.0
    %195 = vmatpush1.msra.mxu0 0.0
    %196 = vmatprep.subr.mxu0 0.0
    %197 = vmatpush1.msra.mxu0 0.0
    %198 = vmatprep.subr.mxu0 0.0
    %199 = vmatpush1.msra.mxu0 0.0
    %200 = vmatprep.subr.mxu0 0.0
    %201 = vmatpush1.msra.mxu0 0.0
    %202 = vmatprep.subr.mxu0 0.0
    %203 = vmatpush1.msra.mxu0 0.0
    %204 = vmatprep.subr.mxu0 0.0
    %205 = vmatpush1.msra.mxu0 0.0
    %206 = vmatprep.subr.mxu0 0.0
    %207 = vmatpush1.msra.mxu0 0.0
    %208 = vmatprep.subr.mxu0 0.0
    %209 = vmatpush1.msra.mxu0 0.0
    %210 = vmatprep.subr.mxu0 0.0
    %211 = vmatpush1.msra.mxu0 0.0
    %212 = vmatprep.mubr.f32.mxu0 0.0
    %213 = vmatmul.mubr.f32.gmra.mrb[0].mxu0 %v146
    %v214 = vpop.f32.mrb[0].mxu0
    %v215 = vadd.f32 0.0, %v214
    %v216 = vpop.f32.mrb[0].mxu0
    %217 = vdwg.mxu0
    %v218 = vadd.f32 %v127, %v215
    %v219 = vxor.u32 %v218, 2147483648
    %v220 = vmul.f32 %v219, 1.442695
    %v221 = vpow.pop %v220
    %v222 = vadd.f32 %v221, 1.0
    %v223 = vrcp.pop %v222
    %v224 = vmul.f32 1.0, %v223
    %225 = vrot.lane.b32.xlu0 %v144, 64
    %v226 = vpop.permute.xlu0 %225
    %v228 = vadd.f32 %v215, %v226
    %230 = vrot.lane.b32.xlu0 %v228, 64
    %v231 = vpop.permute.xlu0 %230
    %v233 = vmul.f32 %v224, %v231
    %235 = vrot.lane.b32.xlu0 %v233, 64
    %v236 = vpop.permute.xlu0 %235
    %v238 = vadd.f32 %v127, %v236
    %v239 = vtanh.pop %v238
    %v240 = vsub.f32 1.0, %v224
    %242 = vrot.lane.b32.xlu0 %v239, 96
    %v243 = vpop.permute.xlu0 %242
    %v245 = vmul.f32 %v240, %v243
    %v246 = vmul.f32 %v224, 0.0
    %v247 = vadd.f32 %v245, %v246
    %249 = vrot.lane.b32.xlu0 %v247, 96
    %v250 = vpop.permute.xlu0 %249
    %vm252 = vcmask 254976
    %253 = vst.msk [vmem:[#allocation2] sm:$0x3] %vm252, %v250
    %v254 = vsel %vm53, %v250, 0
    %256 = vmatprep.subr.mxu0 0.0
    %257 = vmatpush1.msra.mxu0 %v135
    %258 = vmatprep.subr.mxu0 0.0
    %259 = vmatpush1.msra.mxu0 %v136
    %260 = vmatprep.subr.mxu0 0.0
    %261 = vmatpush1.msra.mxu0 %v137
    %262 = vmatprep.subr.mxu0 0.0
    %263 = vmatpush1.msra.mxu0 %v138
    %264 = vmatprep.subr.mxu0 0.0
    %265 = vmatpush1.msra.mxu0 0.0
    %266 = vmatprep.subr.mxu0 0.0
    %267 = vmatpush1.msra.mxu0 0.0
    %268 = vmatprep.subr.mxu0 0.0
    %269 = vmatpush1.msra.mxu0 0.0
    %270 = vmatprep.subr.mxu0 0.0
    %271 = vmatpush1.msra.mxu0 0.0
    %272 = vmatprep.subr.mxu0 0.0
    %273 = vmatpush1.msra.mxu0 0.0
    %274 = vmatprep.subr.mxu0 0.0
    %275 = vmatpush1.msra.mxu0 0.0
    %276 = vmatprep.subr.mxu0 0.0
    %277 = vmatpush1.msra.mxu0 0.0
    %278 = vmatprep.subr.mxu0 0.0
    %279 = vmatpush1.msra.mxu0 0.0
    %280 = vmatprep.subr.mxu0 0.0
    %281 = vmatpush1.msra.mxu0 0.0
    %282 = vmatprep.subr.mxu0 0.0
    %283 = vmatpush1.msra.mxu0 0.0
    %284 = vmatprep.subr.mxu0 0.0
    %285 = vmatpush1.msra.mxu0 0.0
    %286 = vmatprep.subr.mxu0 0.0
    %287 = vmatpush1.msra.mxu0 0.0
    %288 = vmatprep.subr.mxu0 0.0
    %289 = vmatpush1.msra.mxu0 0.0
    %290 = vmatprep.subr.mxu0 0.0
    %291 = vmatpush1.msra.mxu0 0.0
    %292 = vmatprep.subr.mxu0 0.0
    %293 = vmatpush1.msra.mxu0 0.0
    %294 = vmatprep.subr.mxu0 0.0
    %295 = vmatpush1.msra.mxu0 0.0
    %296 = vmatprep.subr.mxu0 0.0
    %297 = vmatpush1.msra.mxu0 0.0
    %298 = vmatprep.subr.mxu0 0.0
    %299 = vmatpush1.msra.mxu0 0.0
    %300 = vmatprep.subr.mxu0 0.0
    %301 = vmatpush1.msra.mxu0 0.0
    %302 = vmatprep.subr.mxu0 0.0
    %303 = vmatpush1.msra.mxu0 0.0
    %304 = vmatprep.subr.mxu0 0.0
    %305 = vmatpush1.msra.mxu0 0.0
    %306 = vmatprep.subr.mxu0 0.0
    %307 = vmatpush1.msra.mxu0 0.0
    %308 = vmatprep.subr.mxu0 0.0
    %309 = vmatpush1.msra.mxu0 0.0
    %310 = vmatprep.subr.mxu0 0.0
    %311 = vmatpush1.msra.mxu0 0.0
    %312 = vmatprep.subr.mxu0 0.0
    %313 = vmatpush1.msra.mxu0 0.0
    %314 = vmatprep.subr.mxu0 0.0
    %315 = vmatpush1.msra.mxu0 0.0
    %316 = vmatprep.subr.mxu0 0.0
    %317 = vmatpush1.msra.mxu0 0.0
    %318 = vmatprep.subr.mxu0 0.0
    %319 = vmatpush1.msra.mxu0 0.0
    %320 = vmatprep.mubr.f32.mxu0 0.0
    %321 = vmatmul.mubr.f32.gmra.mrb[0].mxu0 %v254
    %v322 = vpop.f32.mrb[0].mxu0
    %v323 = vadd.f32 0.0, %v322
    %v324 = vpop.f32.mrb[0].mxu0
    %325 = vdwg.mxu0
    %v327 = vrot.slane %v323, 6
    %v329 = vadd.f32 %v127, %v327
    %v330 = vxor.u32 %v329, 2147483648
    %v331 = vmul.f32 %v330, 1.442695
    %v332 = vpow.pop %v331
    %v333 = vadd.f32 %v332, 1.0
    %v334 = vrcp.pop %v333
    %v335 = vmul.f32 1.0, %v334
    %v336 = vadd.f32 %v323, %v226
    %v338 = vrot.slane %v336, 6
    %339 = vrot.lane.b32.xlu0 %v338, 64
    %v340 = vpop.permute.xlu0 %339
    %v342 = vmul.f32 %v335, %v340
    %344 = vrot.lane.b32.xlu0 %v342, 64
    %v345 = vpop.permute.xlu0 %344
    %v347 = vadd.f32 %v127, %v345
    %v348 = vtanh.pop %v347
    %v349 = vsub.f32 1.0, %v335
    %351 = vrot.lane.b32.xlu0 %v348, 96
    %v352 = vpop.permute.xlu0 %351
    %v354 = vmul.f32 %v349, %v352
    %v355 = vrot.slane %v247, 6
    %v357 = vmul.f32 %v335, %v355
    %v358 = vadd.f32 %v354, %v357
    %360 = vrot.lane.b32.xlu0 %v358, 96
    %v361 = vpop.permute.xlu0 %360
    %vm363 = vcmask 257026
    %364 = vst.msk [vmem:[#allocation2] sm:$0xc] %vm363, %v361
    %v365 = vrot.slane %v358, 2
    %366 = vrot.lane.b32.xlu0 %v365, 96
    %v367 = vpop.permute.xlu0 %366
    %v368 = vsel %vm53, %v367, 0
    %370 = vmatprep.subr.mxu0 0.0
    %371 = vmatpush1.msra.mxu0 %v135
    %372 = vmatprep.subr.mxu0 0.0
    %373 = vmatpush1.msra.mxu0 %v136
    %374 = vmatprep.subr.mxu0 0.0
    %375 = vmatpush1.msra.mxu0 %v137
    %376 = vmatprep.subr.mxu0 0.0
    %377 = vmatpush1.msra.mxu0 %v138
    %378 = vmatprep.subr.mxu0 0.0
    %379 = vmatpush1.msra.mxu0 0.0
    %380 = vmatprep.subr.mxu0 0.0
    %381 = vmatpush1.msra.mxu0 0.0
    %382 = vmatprep.subr.mxu0 0.0
    %383 = vmatpush1.msra.mxu0 0.0
    %384 = vmatprep.subr.mxu0 0.0
    %385 = vmatpush1.msra.mxu0 0.0
    %386 = vmatprep.subr.mxu0 0.0
    %387 = vmatpush1.msra.mxu0 0.0
    %388 = vmatprep.subr.mxu0 0.0
    %389 = vmatpush1.msra.mxu0 0.0
    %390 = vmatprep.subr.mxu0 0.0
    %391 = vmatpush1.msra.mxu0 0.0
    %392 = vmatprep.subr.mxu0 0.0
    %393 = vmatpush1.msra.mxu0 0.0
    %394 = vmatprep.subr.mxu0 0.0
    %395 = vmatpush1.msra.mxu0 0.0
    %396 = vmatprep.subr.mxu0 0.0
    %397 = vmatpush1.msra.mxu0 0.0
    %398 = vmatprep.subr.mxu0 0.0
    %399 = vmatpush1.msra.mxu0 0.0
    %400 = vmatprep.subr.mxu0 0.0
    %401 = vmatpush1.msra.mxu0 0.0
    %402 = vmatprep.subr.mxu0 0.0
    %403 = vmatpush1.msra.mxu0 0.0
    %404 = vmatprep.subr.mxu0 0.0
    %405 = vmatpush1.msra.mxu0 0.0
    %406 = vmatprep.subr.mxu0 0.0
    %407 = vmatpush1.msra.mxu0 0.0
    %408 = vmatprep.subr.mxu0 0.0
    %409 = vmatpush1.msra.mxu0 0.0
    %410 = vmatprep.subr.mxu0 0.0
    %411 = vmatpush1.msra.mxu0 0.0
    %412 = vmatprep.subr.mxu0 0.0
    %413 = vmatpush1.msra.mxu0 0.0
    %414 = vmatprep.subr.mxu0 0.0
    %415 = vmatpush1.msra.mxu0 0.0
    %416 = vmatprep.subr.mxu0 0.0
    %417 = vmatpush1.msra.mxu0 0.0
    %418 = vmatprep.subr.mxu0 0.0
    %419 = vmatpush1.msra.mxu0 0.0
    %420 = vmatprep.subr.mxu0 0.0
    %421 = vmatpush1.msra.mxu0 0.0
    %422 = vmatprep.subr.mxu0 0.0
    %423 = vmatpush1.msra.mxu0 0.0
    %424 = vmatprep.subr.mxu0 0.0
    %425 = vmatpush1.msra.mxu0 0.0
    %426 = vmatprep.subr.mxu0 0.0
    %427 = vmatpush1.msra.mxu0 0.0
    %428 = vmatprep.subr.mxu0 0.0
    %429 = vmatpush1.msra.mxu0 0.0
    %430 = vmatprep.subr.mxu0 0.0
    %431 = vmatpush1.msra.mxu0 0.0
    %432 = vmatprep.subr.mxu0 0.0
    %433 = vmatpush1.msra.mxu0 0.0
    %434 = vmatprep.mubr.f32.mxu0 0.0
    %435 = vmatmul.mubr.f32.gmra.mrb[0].mxu0 %v368
    %v436 = vpop.f32.mrb[0].mxu0
    %v437 = vadd.f32 0.0, %v436
    %v438 = vpop.f32.mrb[0].mxu0
    %439 = vdwg.mxu0
    %v441 = vrot.slane %v437, 4
    %v443 = vadd.f32 %v127, %v441
    %v444 = vxor.u32 %v443, 2147483648
    %v445 = vmul.f32 %v444, 1.442695
    %v446 = vpow.pop %v445
    %v447 = vadd.f32 %v446, 1.0
    %v448 = vrcp.pop %v447
    %v449 = vmul.f32 1.0, %v448
    %v450 = vadd.f32 %v437, %v226
    %v452 = vrot.slane %v450, 4
    %453 = vrot.lane.b32.xlu0 %v452, 64
    %v454 = vpop.permute.xlu0 %453
    %v456 = vmul.f32 %v449, %v454
    %458 = vrot.lane.b32.xlu0 %v456, 64
    %v459 = vpop.permute.xlu0 %458
    %v461 = vadd.f32 %v127, %v459
    %v462 = vtanh.pop %v461
    %v463 = vsub.f32 1.0, %v449
    %465 = vrot.lane.b32.xlu0 %v462, 96
    %v466 = vpop.permute.xlu0 %465
    %v468 = vmul.f32 %v463, %v466
    %v469 = vrot.slane %v358, 6
    %v471 = vmul.f32 %v449, %v469
    %v472 = vadd.f32 %v468, %v471
    %474 = vrot.lane.b32.xlu0 %v472, 96
    %v475 = vpop.permute.xlu0 %474
    %vm477 = vcmask 259076
    %478 = vst.msk [vmem:[#allocation2] sm:$0x30] %vm477, %v475
    %v479 = vrot.slane %v472, 4
    %480 = vrot.lane.b32.xlu0 %v479, 96
    %v481 = vpop.permute.xlu0 %480
    %v482 = vsel %vm53, %v481, 0
    %484 = vmatprep.subr.mxu0 0.0
    %485 = vmatpush1.msra.mxu0 %v135
    %486 = vmatprep.subr.mxu0 0.0
    %487 = vmatpush1.msra.mxu0 %v136
    %488 = vmatprep.subr.mxu0 0.0
    %489 = vmatpush1.msra.mxu0 %v137
    %490 = vmatprep.subr.mxu0 0.0
    %491 = vmatpush1.msra.mxu0 %v138
    %492 = vmatprep.subr.mxu0 0.0
    %493 = vmatpush1.msra.mxu0 0.0
    %494 = vmatprep.subr.mxu0 0.0
    %495 = vmatpush1.msra.mxu0 0.0
    %496 = vmatprep.subr.mxu0 0.0
    %497 = vmatpush1.msra.mxu0 0.0
    %498 = vmatprep.subr.mxu0 0.0
    %499 = vmatpush1.msra.mxu0 0.0
    %500 = vmatprep.subr.mxu0 0.0
    %501 = vmatpush1.msra.mxu0 0.0
    %502 = vmatprep.subr.mxu0 0.0
    %503 = vmatpush1.msra.mxu0 0.0
    %504 = vmatprep.subr.mxu0 0.0
    %505 = vmatpush1.msra.mxu0 0.0
    %506 = vmatprep.subr.mxu0 0.0
    %507 = vmatpush1.msra.mxu0 0.0
    %508 = vmatprep.subr.mxu0 0.0
    %509 = vmatpush1.msra.mxu0 0.0
    %510 = vmatprep.subr.mxu0 0.0
    %511 = vmatpush1.msra.mxu0 0.0
    %512 = vmatprep.subr.mxu0 0.0
    %513 = vmatpush1.msra.mxu0 0.0
    %514 = vmatprep.subr.mxu0 0.0
    %515 = vmatpush1.msra.mxu0 0.0
    %516 = vmatprep.subr.mxu0 0.0
    %517 = vmatpush1.msra.mxu0 0.0
    %518 = vmatprep.subr.mxu0 0.0
    %519 = vmatpush1.msra.mxu0 0.0
    %520 = vmatprep.subr.mxu0 0.0
    %521 = vmatpush1.msra.mxu0 0.0
    %522 = vmatprep.subr.mxu0 0.0
    %523 = vmatpush1.msra.mxu0 0.0
    %524 = vmatprep.subr.mxu0 0.0
    %525 = vmatpush1.msra.mxu0 0.0
    %526 = vmatprep.subr.mxu0 0.0
    %527 = vmatpush1.msra.mxu0 0.0
    %528 = vmatprep.subr.mxu0 0.0
    %529 = vmatpush1.msra.mxu0 0.0
    %530 = vmatprep.subr.mxu0 0.0
    %531 = vmatpush1.msra.mxu0 0.0
    %532 = vmatprep.subr.mxu0 0.0
    %533 = vmatpush1.msra.mxu0 0.0
    %534 = vmatprep.subr.mxu0 0.0
    %535 = vmatpush1.msra.mxu0 0.0
    %536 = vmatprep.subr.mxu0 0.0
    %537 = vmatpush1.msra.mxu0 0.0
    %538 = vmatprep.subr.mxu0 0.0
    %539 = vmatpush1.msra.mxu0 0.0
    %540 = vmatprep.subr.mxu0 0.0
    %541 = vmatpush1.msra.mxu0 0.0
    %542 = vmatprep.subr.mxu0 0.0
    %543 = vmatpush1.msra.mxu0 0.0
    %544 = vmatprep.subr.mxu0 0.0
    %545 = vmatpush1.msra.mxu0 0.0
    %546 = vmatprep.subr.mxu0 0.0
    %547 = vmatpush1.msra.mxu0 0.0
    %548 = vmatprep.mubr.f32.mxu0 0.0
    %549 = vmatmul.mubr.f32.gmra.mrb[0].mxu0 %v482
    %v550 = vpop.f32.mrb[0].mxu0
    %v551 = vadd.f32 0.0, %v550
    %v552 = vpop.f32.mrb[0].mxu0
    %553 = vdwg.mxu0
    %v555 = vrot.slane %v551, 2
    %v557 = vadd.f32 %v127, %v555
    %v558 = vxor.u32 %v557, 2147483648
    %v559 = vmul.f32 %v558, 1.442695
    %v560 = vpow.pop %v559
    %v561 = vadd.f32 %v560, 1.0
    %v562 = vrcp.pop %v561
    %v563 = vmul.f32 1.0, %v562
    %v564 = vadd.f32 %v551, %v226
    %v566 = vrot.slane %v564, 2
    %567 = vrot.lane.b32.xlu0 %v566, 64
    %v568 = vpop.permute.xlu0 %567
    %v570 = vmul.f32 %v563, %v568
    %572 = vrot.lane.b32.xlu0 %v570, 64
    %v573 = vpop.permute.xlu0 %572
    %v575 = vadd.f32 %v127, %v573
    %v576 = vtanh.pop %v575
    %v577 = vsub.f32 1.0, %v563
    %579 = vrot.lane.b32.xlu0 %v576, 96
    %v580 = vpop.permute.xlu0 %579
    %v582 = vmul.f32 %v577, %v580
    %v583 = vrot.slane %v472, 6
    %v585 = vmul.f32 %v563, %v583
    %v586 = vadd.f32 %v582, %v585
    %588 = vrot.lane.b32.xlu0 %v586, 96
    %v589 = vpop.permute.xlu0 %588
    %vm591 = vcmask 261126
    %592 = vst.msk [vmem:[#allocation2] sm:$0xc0] %vm591, %v589
    %v593 = vrot.slane %v586, 6
    %594 = vrot.lane.b32.xlu0 %v593, 96
    %v595 = vpop.permute.xlu0 %594
    %v596 = vsel %vm53, %v595, 0
    %598 = vmatprep.subr.mxu0 0.0
    %599 = vmatpush1.msra.mxu0 %v135
    %600 = vmatprep.subr.mxu0 0.0
    %601 = vmatpush1.msra.mxu0 %v136
    %602 = vmatprep.subr.mxu0 0.0
    %603 = vmatpush1.msra.mxu0 %v137
    %604 = vmatprep.subr.mxu0 0.0
    %605 = vmatpush1.msra.mxu0 %v138
    %606 = vmatprep.subr.mxu0 0.0
    %607 = vmatpush1.msra.mxu0 0.0
    %608 = vmatprep.subr.mxu0 0.0
    %609 = vmatpush1.msra.mxu0 0.0
    %610 = vmatprep.subr.mxu0 0.0
    %611 = vmatpush1.msra.mxu0 0.0
    %612 = vmatprep.subr.mxu0 0.0
    %613 = vmatpush1.msra.mxu0 0.0
    %614 = vmatprep.subr.mxu0 0.0
    %615 = vmatpush1.msra.mxu0 0.0
    %616 = vmatprep.subr.mxu0 0.0
    %617 = vmatpush1.msra.mxu0 0.0
    %618 = vmatprep.subr.mxu0 0.0
    %619 = vmatpush1.msra.mxu0 0.0
    %620 = vmatprep.subr.mxu0 0.0
    %621 = vmatpush1.msra.mxu0 0.0
    %622 = vmatprep.subr.mxu0 0.0
    %623 = vmatpush1.msra.mxu0 0.0
    %624 = vmatprep.subr.mxu0 0.0
    %625 = vmatpush1.msra.mxu0 0.0
    %626 = vmatprep.subr.mxu0 0.0
    %627 = vmatpush1.msra.mxu0 0.0
    %628 = vmatprep.subr.mxu0 0.0
    %629 = vmatpush1.msra.mxu0 0.0
    %630 = vmatprep.subr.mxu0 0.0
    %631 = vmatpush1.msra.mxu0 0.0
    %632 = vmatprep.subr.mxu0 0.0
    %633 = vmatpush1.msra.mxu0 0.0
    %634 = vmatprep.subr.mxu0 0.0
    %635 = vmatpush1.msra.mxu0 0.0
    %636 = vmatprep.subr.mxu0 0.0
    %637 = vmatpush1.msra.mxu0 0.0
    %638 = vmatprep.subr.mxu0 0.0
    %639 = vmatpush1.msra.mxu0 0.0
    %640 = vmatprep.subr.mxu0 0.0
    %641 = vmatpush1.msra.mxu0 0.0
    %642 = vmatprep.subr.mxu0 0.0
    %643 = vmatpush1.msra.mxu0 0.0
    %644 = vmatprep.subr.mxu0 0.0
    %645 = vmatpush1.msra.mxu0 0.0
    %646 = vmatprep.subr.mxu0 0.0
    %647 = vmatpush1.msra.mxu0 0.0
    %648 = vmatprep.subr.mxu0 0.0
    %649 = vmatpush1.msra.mxu0 0.0
    %650 = vmatprep.subr.mxu0 0.0
    %651 = vmatpush1.msra.mxu0 0.0
    %652 = vmatprep.subr.mxu0 0.0
    %653 = vmatpush1.msra.mxu0 0.0
    %654 = vmatprep.subr.mxu0 0.0
    %655 = vmatpush1.msra.mxu0 0.0
    %656 = vmatprep.subr.mxu0 0.0
    %657 = vmatpush1.msra.mxu0 0.0
    %658 = vmatprep.subr.mxu0 0.0
    %659 = vmatpush1.msra.mxu0 0.0
    %660 = vmatprep.subr.mxu0 0.0
    %661 = vmatpush1.msra.mxu0 0.0
    %662 = vmatprep.mubr.f32.mxu0 0.0
    %663 = vmatmul.mubr.f32.gmra.mrb[0].mxu0 %v596
    %v664 = vpop.f32.mrb[0].mxu0
    %v665 = vadd.f32 0.0, %v664
    %v666 = vpop.f32.mrb[0].mxu0
    %667 = vdwg.mxu0
    %v668 = vadd.f32 %v132, %v665
    %v669 = vxor.u32 %v668, 2147483648
    %v670 = vmul.f32 %v669, 1.442695
    %v671 = vpow.pop %v670
    %v672 = vadd.f32 %v671, 1.0
    %v673 = vrcp.pop %v672
    %v674 = vmul.f32 1.0, %v673
    %v675 = vadd.f32 %v665, %v226
    %677 = vrot.lane.b32.xlu0 %v675, 64
    %v678 = vpop.permute.xlu0 %677
    %v680 = vmul.f32 %v674, %v678
    %682 = vrot.lane.b32.xlu0 %v680, 64
    %v683 = vpop.permute.xlu0 %682
    %v685 = vadd.f32 %v132, %v683
    %v686 = vtanh.pop %v685
    %v687 = vsub.f32 1.0, %v674
    %689 = vrot.lane.b32.xlu0 %v686, 96
    %v690 = vpop.permute.xlu0 %689
    %v692 = vmul.f32 %v687, %v690
    %v694 = vmul.f32 %v674, %v593
    %v695 = vadd.f32 %v692, %v694
    %697 = vrot.lane.b32.xlu0 %v695, 96
    %v698 = vpop.permute.xlu0 %697
    %700 = vst.msk [vmem:[#allocation2 + $0x8] sm:$0x3] %vm252, %v698
    %v701 = vsel %vm53, %v698, 0
    %703 = vmatprep.subr.mxu0 0.0
    %704 = vmatpush1.msra.mxu0 %v135
    %705 = vmatprep.subr.mxu0 0.0
    %706 = vmatpush1.msra.mxu0 %v136
    %707 = vmatprep.subr.mxu0 0.0
    %708 = vmatpush1.msra.mxu0 %v137
    %709 = vmatprep.subr.mxu0 0.0
    %710 = vmatpush1.msra.mxu0 %v138
    %711 = vmatprep.subr.mxu0 0.0
    %712 = vmatpush1.msra.mxu0 0.0
    %713 = vmatprep.subr.mxu0 0.0
    %714 = vmatpush1.msra.mxu0 0.0
    %715 = vmatprep.subr.mxu0 0.0
    %716 = vmatpush1.msra.mxu0 0.0
    %717 = vmatprep.subr.mxu0 0.0
    %718 = vmatpush1.msra.mxu0 0.0
    %719 = vmatprep.subr.mxu0 0.0
    %720 = vmatpush1.msra.mxu0 0.0
    %721 = vmatprep.subr.mxu0 0.0
    %722 = vmatpush1.msra.mxu0 0.0
    %723 = vmatprep.subr.mxu0 0.0
    %724 = vmatpush1.msra.mxu0 0.0
    %725 = vmatprep.subr.mxu0 0.0
    %726 = vmatpush1.msra.mxu0 0.0
    %727 = vmatprep.subr.mxu0 0.0
    %728 = vmatpush1.msra.mxu0 0.0
    %729 = vmatprep.subr.mxu0 0.0
    %730 = vmatpush1.msra.mxu0 0.0
    %731 = vmatprep.subr.mxu0 0.0
    %732 = vmatpush1.msra.mxu0 0.0
    %733 = vmatprep.subr.mxu0 0.0
    %734 = vmatpush1.msra.mxu0 0.0
    %735 = vmatprep.subr.mxu0 0.0
    %736 = vmatpush1.msra.mxu0 0.0
    %737 = vmatprep.subr.mxu0 0.0
    %738 = vmatpush1.msra.mxu0 0.0
    %739 = vmatprep.subr.mxu0 0.0
    %740 = vmatpush1.msra.mxu0 0.0
    %741 = vmatprep.subr.mxu0 0.0
    %742 = vmatpush1.msra.mxu0 0.0
    %743 = vmatprep.subr.mxu0 0.0
    %744 = vmatpush1.msra.mxu0 0.0
    %745 = vmatprep.subr.mxu0 0.0
    %746 = vmatpush1.msra.mxu0 0.0
    %747 = vmatprep.subr.mxu0 0.0
    %748 = vmatpush1.msra.mxu0 0.0
    %749 = vmatprep.subr.mxu0 0.0
    %750 = vmatpush1.msra.mxu0 0.0
    %751 = vmatprep.subr.mxu0 0.0
    %752 = vmatpush1.msra.mxu0 0.0
    %753 = vmatprep.subr.mxu0 0.0
    %754 = vmatpush1.msra.mxu0 0.0
    %755 = vmatprep.subr.mxu0 0.0
    %756 = vmatpush1.msra.mxu0 0.0
    %757 = vmatprep.subr.mxu0 0.0
    %758 = vmatpush1.msra.mxu0 0.0
    %759 = vmatprep.subr.mxu0 0.0
    %760 = vmatpush1.msra.mxu0 0.0
    %761 = vmatprep.subr.mxu0 0.0
    %762 = vmatpush1.msra.mxu0 0.0
    %763 = vmatprep.subr.mxu0 0.0
    %764 = vmatpush1.msra.mxu0 0.0
    %765 = vmatprep.subr.mxu0 0.0
    %766 = vmatpush1.msra.mxu0 0.0
    %767 = vmatprep.mubr.f32.mxu0 0.0
    %768 = vmatmul.mubr.f32.gmra.mrb[0].mxu0 %v701
    %v769 = vpop.f32.mrb[0].mxu0
    %v770 = vadd.f32 0.0, %v769
    %v771 = vpop.f32.mrb[0].mxu0
    %772 = vdwg.mxu0
    %v774 = vrot.slane %v770, 6
    %v776 = vadd.f32 %v132, %v774
    %v777 = vxor.u32 %v776, 2147483648
    %v778 = vmul.f32 %v777, 1.442695
    %v779 = vpow.pop %v778
    %v780 = vadd.f32 %v779, 1.0
    %v781 = vrcp.pop %v780
    %v782 = vmul.f32 1.0, %v781
    %v783 = vadd.f32 %v770, %v226
    %v785 = vrot.slane %v783, 6
    %786 = vrot.lane.b32.xlu0 %v785, 64
    %v787 = vpop.permute.xlu0 %786
    %v789 = vmul.f32 %v782, %v787
    %791 = vrot.lane.b32.xlu0 %v789, 64
    %v792 = vpop.permute.xlu0 %791
    %v794 = vadd.f32 %v132, %v792
    %v795 = vtanh.pop %v794
    %v796 = vsub.f32 1.0, %v782
    %798 = vrot.lane.b32.xlu0 %v795, 96
    %v799 = vpop.permute.xlu0 %798
    %v801 = vmul.f32 %v796, %v799
    %v802 = vrot.slane %v695, 6
    %v804 = vmul.f32 %v782, %v802
    %v805 = vadd.f32 %v801, %v804
    %807 = vrot.lane.b32.xlu0 %v805, 96
    %v808 = vpop.permute.xlu0 %807
    %810 = vst.msk [vmem:[#allocation2 + $0x8] sm:$0xc] %vm363, %v808
    %v811 = vrot.slane %v805, 2
    %812 = vrot.lane.b32.xlu0 %v811, 96
    %v813 = vpop.permute.xlu0 %812
    %v814 = vsel %vm53, %v813, 0
    %816 = vmatprep.subr.mxu0 0.0
    %817 = vmatpush1.msra.mxu0 %v135
    %818 = vmatprep.subr.mxu0 0.0
    %819 = vmatpush1.msra.mxu0 %v136
    %820 = vmatprep.subr.mxu0 0.0
    %821 = vmatpush1.msra.mxu0 %v137
    %822 = vmatprep.subr.mxu0 0.0
    %823 = vmatpush1.msra.mxu0 %v138
    %824 = vmatprep.subr.mxu0 0.0
    %825 = vmatpush1.msra.mxu0 0.0
    %826 = vmatprep.subr.mxu0 0.0
    %827 = vmatpush1.msra.mxu0 0.0
    %828 = vmatprep.subr.mxu0 0.0
    %829 = vmatpush1.msra.mxu0 0.0
    %830 = vmatprep.subr.mxu0 0.0
    %831 = vmatpush1.msra.mxu0 0.0
    %832 = vmatprep.subr.mxu0 0.0
    %833 = vmatpush1.msra.mxu0 0.0
    %834 = vmatprep.subr.mxu0 0.0
    %835 = vmatpush1.msra.mxu0 0.0
    %836 = vmatprep.subr.mxu0 0.0
    %837 = vmatpush1.msra.mxu0 0.0
    %838 = vmatprep.subr.mxu0 0.0
    %839 = vmatpush1.msra.mxu0 0.0
    %840 = vmatprep.subr.mxu0 0.0
    %841 = vmatpush1.msra.mxu0 0.0
    %842 = vmatprep.subr.mxu0 0.0
    %843 = vmatpush1.msra.mxu0 0.0
    %844 = vmatprep.subr.mxu0 0.0
    %845 = vmatpush1.msra.mxu0 0.0
    %846 = vmatprep.subr.mxu0 0.0
    %847 = vmatpush1.msra.mxu0 0.0
    %848 = vmatprep.subr.mxu0 0.0
    %849 = vmatpush1.msra.mxu0 0.0
    %850 = vmatprep.subr.mxu0 0.0
    %851 = vmatpush1.msra.mxu0 0.0
    %852 = vmatprep.subr.mxu0 0.0
    %853 = vmatpush1.msra.mxu0 0.0
    %854 = vmatprep.subr.mxu0 0.0
    %855 = vmatpush1.msra.mxu0 0.0
    %856 = vmatprep.subr.mxu0 0.0
    %857 = vmatpush1.msra.mxu0 0.0
    %858 = vmatprep.subr.mxu0 0.0
    %859 = vmatpush1.msra.mxu0 0.0
    %860 = vmatprep.subr.mxu0 0.0
    %861 = vmatpush1.msra.mxu0 0.0
    %862 = vmatprep.subr.mxu0 0.0
    %863 = vmatpush1.msra.mxu0 0.0
    %864 = vmatprep.subr.mxu0 0.0
    %865 = vmatpush1.msra.mxu0 0.0
    %866 = vmatprep.subr.mxu0 0.0
    %867 = vmatpush1.msra.mxu0 0.0
    %868 = vmatprep.subr.mxu0 0.0
    %869 = vmatpush1.msra.mxu0 0.0
    %870 = vmatprep.subr.mxu0 0.0
    %871 = vmatpush1.msra.mxu0 0.0
    %872 = vmatprep.subr.mxu0 0.0
    %873 = vmatpush1.msra.mxu0 0.0
    %874 = vmatprep.subr.mxu0 0.0
    %875 = vmatpush1.msra.mxu0 0.0
    %876 = vmatprep.subr.mxu0 0.0
    %877 = vmatpush1.msra.mxu0 0.0
    %878 = vmatprep.subr.mxu0 0.0
    %879 = vmatpush1.msra.mxu0 0.0
    %880 = vmatprep.mubr.f32.mxu0 0.0
    %881 = vmatmul.mubr.f32.gmra.mrb[0].mxu0 %v814
    %v882 = vpop.f32.mrb[0].mxu0
    %v883 = vadd.f32 0.0, %v882
    %v884 = vpop.f32.mrb[0].mxu0
    %885 = vdwg.mxu0
    %v887 = vrot.slane %v883, 4
    %v889 = vadd.f32 %v132, %v887
    %v890 = vxor.u32 %v889, 2147483648
    %v891 = vmul.f32 %v890, 1.442695
    %v892 = vpow.pop %v891
    %v893 = vadd.f32 %v892, 1.0
    %v894 = vrcp.pop %v893
    %v895 = vmul.f32 1.0, %v894
    %v896 = vadd.f32 %v883, %v226
    %v898 = vrot.slane %v896, 4
    %899 = vrot.lane.b32.xlu0 %v898, 64
    %v900 = vpop.permute.xlu0 %899
    %v902 = vmul.f32 %v895, %v900
    %904 = vrot.lane.b32.xlu0 %v902, 64
    %v905 = vpop.permute.xlu0 %904
    %v907 = vadd.f32 %v132, %v905
    %v908 = vtanh.pop %v907
    %v909 = vsub.f32 1.0, %v895
    %911 = vrot.lane.b32.xlu0 %v908, 96
    %v912 = vpop.permute.xlu0 %911
    %v914 = vmul.f32 %v909, %v912
    %v915 = vrot.slane %v805, 6
    %v917 = vmul.f32 %v895, %v915
    %v918 = vadd.f32 %v914, %v917
    %920 = vrot.lane.b32.xlu0 %v918, 96
    %v921 = vpop.permute.xlu0 %920
    %923 = vst.msk [vmem:[#allocation2 + $0x8] sm:$0x30] %vm477, %v921
    %v924 = vrot.slane %v918, 4
    %925 = vrot.lane.b32.xlu0 %v924, 96
    %v926 = vpop.permute.xlu0 %925
    %v927 = vsel %vm53, %v926, 0
    %929 = vmatprep.subr.mxu0 0.0
    %930 = vmatpush1.msra.mxu0 %v135
    %931 = vmatprep.subr.mxu0 0.0
    %932 = vmatpush1.msra.mxu0 %v136
    %933 = vmatprep.subr.mxu0 0.0
    %934 = vmatpush1.msra.mxu0 %v137
    %935 = vmatprep.subr.mxu0 0.0
    %936 = vmatpush1.msra.mxu0 %v138
    %937 = vmatprep.subr.mxu0 0.0
    %938 = vmatpush1.msra.mxu0 0.0
    %939 = vmatprep.subr.mxu0 0.0
    %940 = vmatpush1.msra.mxu0 0.0
    %941 = vmatprep.subr.mxu0 0.0
    %942 = vmatpush1.msra.mxu0 0.0
    %943 = vmatprep.subr.mxu0 0.0
    %944 = vmatpush1.msra.mxu0 0.0
    %945 = vmatprep.subr.mxu0 0.0
    %946 = vmatpush1.msra.mxu0 0.0
    %947 = vmatprep.subr.mxu0 0.0
    %948 = vmatpush1.msra.mxu0 0.0
    %949 = vmatprep.subr.mxu0 0.0
    %950 = vmatpush1.msra.mxu0 0.0
    %951 = vmatprep.subr.mxu0 0.0
    %952 = vmatpush1.msra.mxu0 0.0
    %953 = vmatprep.subr.mxu0 0.0
    %954 = vmatpush1.msra.mxu0 0.0
    %955 = vmatprep.subr.mxu0 0.0
    %956 = vmatpush1.msra.mxu0 0.0
    %957 = vmatprep.subr.mxu0 0.0
    %958 = vmatpush1.msra.mxu0 0.0
    %959 = vmatprep.subr.mxu0 0.0
    %960 = vmatpush1.msra.mxu0 0.0
    %961 = vmatprep.subr.mxu0 0.0
    %962 = vmatpush1.msra.mxu0 0.0
    %963 = vmatprep.subr.mxu0 0.0
    %964 = vmatpush1.msra.mxu0 0.0
    %965 = vmatprep.subr.mxu0 0.0
    %966 = vmatpush1.msra.mxu0 0.0
    %967 = vmatprep.subr.mxu0 0.0
    %968 = vmatpush1.msra.mxu0 0.0
    %969 = vmatprep.subr.mxu0 0.0
    %970 = vmatpush1.msra.mxu0 0.0
    %971 = vmatprep.subr.mxu0 0.0
    %972 = vmatpush1.msra.mxu0 0.0
    %973 = vmatprep.subr.mxu0 0.0
    %974 = vmatpush1.msra.mxu0 0.0
    %975 = vmatprep.subr.mxu0 0.0
    %976 = vmatpush1.msra.mxu0 0.0
    %977 = vmatprep.subr.mxu0 0.0
    %978 = vmatpush1.msra.mxu0 0.0
    %979 = vmatprep.subr.mxu0 0.0
    %980 = vmatpush1.msra.mxu0 0.0
    %981 = vmatprep.subr.mxu0 0.0
    %982 = vmatpush1.msra.mxu0 0.0
    %983 = vmatprep.subr.mxu0 0.0
    %984 = vmatpush1.msra.mxu0 0.0
    %985 = vmatprep.subr.mxu0 0.0
    %986 = vmatpush1.msra.mxu0 0.0
    %987 = vmatprep.subr.mxu0 0.0
    %988 = vmatpush1.msra.mxu0 0.0
    %989 = vmatprep.subr.mxu0 0.0
    %990 = vmatpush1.msra.mxu0 0.0
    %991 = vmatprep.subr.mxu0 0.0
    %992 = vmatpush1.msra.mxu0 0.0
    %993 = vmatprep.mubr.f32.mxu0 0.0
    %994 = vmatmul.mubr.f32.gmra.mrb[0].mxu0 %v927
    %v995 = vpop.f32.mrb[0].mxu0
    %v996 = vadd.f32 0.0, %v995
    %v997 = vpop.f32.mrb[0].mxu0
    %998 = vdwg.mxu0
    %v1000 = vrot.slane %v996, 2
    %v1002 = vadd.f32 %v132, %v1000
    %v1003 = vxor.u32 %v1002, 2147483648
    %v1004 = vmul.f32 %v1003, 1.442695
    %v1005 = vpow.pop %v1004
    %v1006 = vadd.f32 %v1005, 1.0
    %v1007 = vrcp.pop %v1006
    %v1008 = vmul.f32 1.0, %v1007
    %v1009 = vadd.f32 %v996, %v226
    %v1011 = vrot.slane %v1009, 2
    %1012 = vrot.lane.b32.xlu0 %v1011, 64
    %v1013 = vpop.permute.xlu0 %1012
    %v1015 = vmul.f32 %v1008, %v1013
    %1017 = vrot.lane.b32.xlu0 %v1015, 64
    %v1018 = vpop.permute.xlu0 %1017
    %v1020 = vadd.f32 %v132, %v1018
    %v1021 = vtanh.pop %v1020
    %v1022 = vsub.f32 1.0, %v1008
    %1024 = vrot.lane.b32.xlu0 %v1021, 96
    %v1025 = vpop.permute.xlu0 %1024
    %v1027 = vmul.f32 %v1022, %v1025
    %v1028 = vrot.slane %v918, 6
    %v1030 = vmul.f32 %v1008, %v1028
    %v1031 = vadd.f32 %v1027, %v1030
    %1033 = vrot.lane.b32.xlu0 %v1031, 96
    %v1034 = vpop.permute.xlu0 %1033
    %1036 = vst.msk [vmem:[#allocation2 + $0x8] sm:$0xc0] %vm591, %v1034
    %v1037 = vld [vmem:[#allocation2] sm:$0xff]
    %v1038 = vld [vmem:[#allocation2 + $0x8] sm:$0xff]
    %s1039 = scalar_lea.vmem %s1, 32
    %v1040 = vld [vmem:[%s1039] sm:$0xff]
    %v1041 = vld [vmem:[%s1039 + $0x8] sm:$0xff]
    %v1042 = vld [vmem:[%s1039 + $0x10] sm:$0xff]
    %v1043 = vld [vmem:[%s1039 + $0x18] sm:$0xff]
    %s1044 = scalar_lea.vmem %s3, 1
    %v1045 = vld [vmem:[%s1044] sm:$0x1]
    %v1047 = vlaneseq
    %v1048 = vshrl.u32 %v1047, 7
    %v1049 = vsub.s32 0, %v1048
    %v1050 = vrot.slane %v1045, %v1049
    %v1053 = vsel %vm53, %v1037, 0
    %v1056 = vsel %vm53, %v1038, 0
    %1058 = vmatprep.subr.mxu0 0.0
    %1059 = vmatpush1.msra.mxu0 %v1040
    %1060 = vmatprep.subr.mxu0 0.0
    %1061 = vmatpush1.msra.mxu0 %v1041
    %1062 = vmatprep.subr.mxu0 0.0
    %1063 = vmatpush1.msra.mxu0 %v1042
    %1064 = vmatprep.subr.mxu0 0.0
    %1065 = vmatpush1.msra.mxu0 %v1043
    %1066 = vmatprep.subr.mxu0 0.0
    %1067 = vmatpush1.msra.mxu0 0.0
    %1068 = vmatprep.subr.mxu0 0.0
    %1069 = vmatpush1.msra.mxu0 0.0
    %1070 = vmatprep.subr.mxu0 0.0
    %1071 = vmatpush1.msra.mxu0 0.0
    %1072 = vmatprep.subr.mxu0 0.0
    %1073 = vmatpush1.msra.mxu0 0.0
    %1074 = vmatprep.subr.mxu0 0.0
    %1075 = vmatpush1.msra.mxu0 0.0
    %1076 = vmatprep.subr.mxu0 0.0
    %1077 = vmatpush1.msra.mxu0 0.0
    %1078 = vmatprep.subr.mxu0 0.0
    %1079 = vmatpush1.msra.mxu0 0.0
    %1080 = vmatprep.subr.mxu0 0.0
    %1081 = vmatpush1.msra.mxu0 0.0
    %1082 = vmatprep.subr.mxu0 0.0
    %1083 = vmatpush1.msra.mxu0 0.0
    %1084 = vmatprep.subr.mxu0 0.0
    %1085 = vmatpush1.msra.mxu0 0.0
    %1086 = vmatprep.subr.mxu0 0.0
    %1087 = vmatpush1.msra.mxu0 0.0
    %1088 = vmatprep.subr.mxu0 0.0
    %1089 = vmatpush1.msra.mxu0 0.0
    %1090 = vmatprep.subr.mxu0 0.0
    %1091 = vmatpush1.msra.mxu0 0.0
    %1092 = vmatprep.subr.mxu0 0.0
    %1093 = vmatpush1.msra.mxu0 0.0
    %1094 = vmatprep.subr.mxu0 0.0
    %1095 = vmatpush1.msra.mxu0 0.0
    %1096 = vmatprep.subr.mxu0 0.0
    %1097 = vmatpush1.msra.mxu0 0.0
    %1098 = vmatprep.subr.mxu0 0.0
    %1099 = vmatpush1.msra.mxu0 0.0
    %1100 = vmatprep.subr.mxu0 0.0
    %1101 = vmatpush1.msra.mxu0 0.0
    %1102 = vmatprep.subr.mxu0 0.0
    %1103 = vmatpush1.msra.mxu0 0.0
    %1104 = vmatprep.subr.mxu0 0.0
    %1105 = vmatpush1.msra.mxu0 0.0
    %1106 = vmatprep.subr.mxu0 0.0
    %1107 = vmatpush1.msra.mxu0 0.0
    %1108 = vmatprep.subr.mxu0 0.0
    %1109 = vmatpush1.msra.mxu0 0.0
    %1110 = vmatprep.subr.mxu0 0.0
    %1111 = vmatpush1.msra.mxu0 0.0
    %1112 = vmatprep.subr.mxu0 0.0
    %1113 = vmatpush1.msra.mxu0 0.0
    %1114 = vmatprep.subr.mxu0 0.0
    %1115 = vmatpush1.msra.mxu0 0.0
    %1116 = vmatprep.subr.mxu0 0.0
    %1117 = vmatpush1.msra.mxu0 0.0
    %1118 = vmatprep.subr.mxu0 0.0
    %1119 = vmatpush1.msra.mxu0 0.0
    %1120 = vmatprep.subr.mxu0 0.0
    %1121 = vmatpush1.msra.mxu0 0.0
    %1122 = vmatprep.mubr.f32.mxu0 0.0
    %1123 = vmatmul.mubr.f32.gmra.mrb[0].mxu0 %v1053
    %v1124 = vpop.f32.mrb[0].mxu0
    %v1125 = vadd.f32 %v1050, %v1124
    %v1126 = vpop.f32.mrb[0].mxu0
    %1127 = vmatprep.mubr.f32.mxu0 0.0
    %1128 = vmatmul.mubr.f32.gmra.mrb[0].mxu0 %v1056
    %v1129 = vpop.f32.mrb[0].mxu0
    %v1130 = vadd.f32 %v1050, %v1129
    %v1131 = vpop.f32.mrb[0].mxu0
    %1132 = vdwg.mxu0
    %s1133 = scalar_lea.vmem [#allocation3], 32
    %v1134 = vld [vmem:[%s1133] sm:$0xff]
    %v1135 = vld [vmem:[%s1133 + $0x8] sm:$0xff]
    %v1136 = vld [vmem:[%s1133 + $0x10] sm:$0xff]
    %v1137 = vld [vmem:[%s1133 + $0x18] sm:$0xff]
    %s1138 = scalar_lea.vmem %s4, 1
    %v1139 = vld [vmem:[%s1138] sm:$0x1]
    %v1141 = vlaneseq
    %v1142 = vshrl.u32 %v1141, 7
    %v1143 = vsub.s32 0, %v1142
    %v1144 = vrot.slane %v1139, %v1143
    %1145 = vmatprep.subr.mxu0 0.0
    %1146 = vmatpush1.msra.mxu0 %v1134
    %1147 = vmatprep.subr.mxu0 0.0
    %1148 = vmatpush1.msra.mxu0 %v1135
    %1149 = vmatprep.subr.mxu0 0.0
    %1150 = vmatpush1.msra.mxu0 %v1136
    %1151 = vmatprep.subr.mxu0 0.0
    %1152 = vmatpush1.msra.mxu0 %v1137
    %1153 = vmatprep.subr.mxu0 0.0
    %1154 = vmatpush1.msra.mxu0 0.0
    %1155 = vmatprep.subr.mxu0 0.0
    %1156 = vmatpush1.msra.mxu0 0.0
    %1157 = vmatprep.subr.mxu0 0.0
    %1158 = vmatpush1.msra.mxu0 0.0
    %1159 = vmatprep.subr.mxu0 0.0
    %1160 = vmatpush1.msra.mxu0 0.0
    %1161 = vmatprep.subr.mxu0 0.0
    %1162 = vmatpush1.msra.mxu0 0.0
    %1163 = vmatprep.subr.mxu0 0.0
    %1164 = vmatpush1.msra.mxu0 0.0
    %1165 = vmatprep.subr.mxu0 0.0
    %1166 = vmatpush1.msra.mxu0 0.0
    %1167 = vmatprep.subr.mxu0 0.0
    %1168 = vmatpush1.msra.mxu0 0.0
    %1169 = vmatprep.subr.mxu0 0.0
    %1170 = vmatpush1.msra.mxu0 0.0
    %1171 = vmatprep.subr.mxu0 0.0
    %1172 = vmatpush1.msra.mxu0 0.0
    %1173 = vmatprep.subr.mxu0 0.0
    %1174 = vmatpush1.msra.mxu0 0.0
    %1175 = vmatprep.subr.mxu0 0.0
    %1176 = vmatpush1.msra.mxu0 0.0
    %1177 = vmatprep.subr.mxu0 0.0
    %1178 = vmatpush1.msra.mxu0 0.0
    %1179 = vmatprep.subr.mxu0 0.0
    %1180 = vmatpush1.msra.mxu0 0.0
    %1181 = vmatprep.subr.mxu0 0.0
    %1182 = vmatpush1.msra.mxu0 0.0
    %1183 = vmatprep.subr.mxu0 0.0
    %1184 = vmatpush1.msra.mxu0 0.0
    %1185 = vmatprep.subr.mxu0 0.0
    %1186 = vmatpush1.msra.mxu0 0.0
    %1187 = vmatprep.subr.mxu0 0.0
    %1188 = vmatpush1.msra.mxu0 0.0
    %1189 = vmatprep.subr.mxu0 0.0
    %1190 = vmatpush1.msra.mxu0 0.0
    %1191 = vmatprep.subr.mxu0 0.0
    %1192 = vmatpush1.msra.mxu0 0.0
    %1193 = vmatprep.subr.mxu0 0.0
    %1194 = vmatpush1.msra.mxu0 0.0
    %1195 = vmatprep.subr.mxu0 0.0
    %1196 = vmatpush1.msra.mxu0 0.0
    %1197 = vmatprep.subr.mxu0 0.0
    %1198 = vmatpush1.msra.mxu0 0.0
    %1199 = vmatprep.subr.mxu0 0.0
    %1200 = vmatpush1.msra.mxu0 0.0
    %1201 = vmatprep.subr.mxu0 0.0
    %1202 = vmatpush1.msra.mxu0 0.0
    %1203 = vmatprep.subr.mxu0 0.0
    %1204 = vmatpush1.msra.mxu0 0.0
    %1205 = vmatprep.subr.mxu0 0.0
    %1206 = vmatpush1.msra.mxu0 0.0
    %1207 = vmatprep.subr.mxu0 0.0
    %1208 = vmatpush1.msra.mxu0 0.0
    %1209 = vmatprep.mubr.f32.mxu0 0.0
    %1210 = vmatmul.mubr.f32.gmra.mrb[0].mxu0 %v146
    %v1211 = vpop.f32.mrb[0].mxu0
    %v1212 = vadd.f32 0.0, %v1211
    %v1213 = vpop.f32.mrb[0].mxu0
    %1214 = vdwg.mxu0
    %v1215 = vadd.f32 %v1125, %v1212
    %v1216 = vxor.u32 %v1215, 2147483648
    %v1217 = vmul.f32 %v1216, 1.442695
    %v1218 = vpow.pop %v1217
    %v1219 = vadd.f32 %v1218, 1.0
    %v1220 = vrcp.pop %v1219
    %v1221 = vmul.f32 1.0, %v1220
    %1222 = vrot.lane.b32.xlu0 %v1144, 64
    %v1223 = vpop.permute.xlu0 %1222
    %v1225 = vadd.f32 %v1212, %v1223
    %1227 = vrot.lane.b32.xlu0 %v1225, 64
    %v1228 = vpop.permute.xlu0 %1227
    %v1230 = vmul.f32 %v1221, %v1228
    %1232 = vrot.lane.b32.xlu0 %v1230, 64
    %v1233 = vpop.permute.xlu0 %1232
    %v1235 = vadd.f32 %v1125, %v1233
    %v1236 = vtanh.pop %v1235
    %v1237 = vsub.f32 1.0, %v1221
    %1239 = vrot.lane.b32.xlu0 %v1236, 96
    %v1240 = vpop.permute.xlu0 %1239
    %v1242 = vmul.f32 %v1237, %v1240
    %v1243 = vmul.f32 %v1221, 0.0
    %v1244 = vadd.f32 %v1242, %v1243
    %1246 = vrot.lane.b32.xlu0 %v1244, 96
    %v1247 = vpop.permute.xlu0 %1246
    %1249 = vst.msk [vmem:[#allocation2] sm:$0x3] %vm252, %v1247
    %v1250 = vsel %vm53, %v1247, 0
    %1252 = vmatprep.subr.mxu0 0.0
    %1253 = vmatpush1.msra.mxu0 %v1134
    %1254 = vmatprep.subr.mxu0 0.0
    %1255 = vmatpush1.msra.mxu0 %v1135
    %1256 = vmatprep.subr.mxu0 0.0
    %1257 = vmatpush1.msra.mxu0 %v1136
    %1258 = vmatprep.subr.mxu0 0.0
    %1259 = vmatpush1.msra.mxu0 %v1137
    %1260 = vmatprep.subr.mxu0 0.0
    %1261 = vmatpush1.msra.mxu0 0.0
    %1262 = vmatprep.subr.mxu0 0.0
    %1263 = vmatpush1.msra.mxu0 0.0
    %1264 = vmatprep.subr.mxu0 0.0
    %1265 = vmatpush1.msra.mxu0 0.0
    %1266 = vmatprep.subr.mxu0 0.0
    %1267 = vmatpush1.msra.mxu0 0.0
    %1268 = vmatprep.subr.mxu0 0.0
    %1269 = vmatpush1.msra.mxu0 0.0
    %1270 = vmatprep.subr.mxu0 0.0
    %1271 = vmatpush1.msra.mxu0 0.0
    %1272 = vmatprep.subr.mxu0 0.0
    %1273 = vmatpush1.msra.mxu0 0.0
    %1274 = vmatprep.subr.mxu0 0.0
    %1275 = vmatpush1.msra.mxu0 0.0
    %1276 = vmatprep.subr.mxu0 0.0
    %1277 = vmatpush1.msra.mxu0 0.0
    %1278 = vmatprep.subr.mxu0 0.0
    %1279 = vmatpush1.msra.mxu0 0.0
    %1280 = vmatprep.subr.mxu0 0.0
    %1281 = vmatpush1.msra.mxu0 0.0
    %1282 = vmatprep.subr.mxu0 0.0
    %1283 = vmatpush1.msra.mxu0 0.0
    %1284 = vmatprep.subr.mxu0 0.0
    %1285 = vmatpush1.msra.mxu0 0.0
    %1286 = vmatprep.subr.mxu0 0.0
    %1287 = vmatpush1.msra.mxu0 0.0
    %1288 = vmatprep.subr.mxu0 0.0
    %1289 = vmatpush1.msra.mxu0 0.0
    %1290 = vmatprep.subr.mxu0 0.0
    %1291 = vmatpush1.msra.mxu0 0.0
    %1292 = vmatprep.subr.mxu0 0.0
    %1293 = vmatpush1.msra.mxu0 0.0
    %1294 = vmatprep.subr.mxu0 0.0
    %1295 = vmatpush1.msra.mxu0 0.0
    %1296 = vmatprep.subr.mxu0 0.0
    %1297 = vmatpush1.msra.mxu0 0.0
    %1298 = vmatprep.subr.mxu0 0.0
    %1299 = vmatpush1.msra.mxu0 0.0
    %1300 = vmatprep.subr.mxu0 0.0
    %1301 = vmatpush1.msra.mxu0 0.0
    %1302 = vmatprep.subr.mxu0 0.0
    %1303 = vmatpush1.msra.mxu0 0.0
    %1304 = vmatprep.subr.mxu0 0.0
    %1305 = vmatpush1.msra.mxu0 0.0
    %1306 = vmatprep.subr.mxu0 0.0
    %1307 = vmatpush1.msra.mxu0 0.0
    %1308 = vmatprep.subr.mxu0 0.0
    %1309 = vmatpush1.msra.mxu0 0.0
    %1310 = vmatprep.subr.mxu0 0.0
    %1311 = vmatpush1.msra.mxu0 0.0
    %1312 = vmatprep.subr.mxu0 0.0
    %1313 = vmatpush1.msra.mxu0 0.0
    %1314 = vmatprep.subr.mxu0 0.0
    %1315 = vmatpush1.msra.mxu0 0.0
    %1316 = vmatprep.mubr.f32.mxu0 0.0
    %1317 = vmatmul.mubr.f32.gmra.mrb[0].mxu0 %v1250
    %v1318 = vpop.f32.mrb[0].mxu0
    %v1319 = vadd.f32 0.0, %v1318
    %v1320 = vpop.f32.mrb[0].mxu0
    %1321 = vdwg.mxu0
    %v1323 = vrot.slane %v1319, 6
    %v1325 = vadd.f32 %v1125, %v1323
    %v1326 = vxor.u32 %v1325, 2147483648
    %v1327 = vmul.f32 %v1326, 1.442695
    %v1328 = vpow.pop %v1327
    %v1329 = vadd.f32 %v1328, 1.0
    %v1330 = vrcp.pop %v1329
    %v1331 = vmul.f32 1.0, %v1330
    %v1332 = vadd.f32 %v1319, %v1223
    %v1334 = vrot.slane %v1332, 6
    %1335 = vrot.lane.b32.xlu0 %v1334, 64
    %v1336 = vpop.permute.xlu0 %1335
    %v1338 = vmul.f32 %v1331, %v1336
    %1340 = vrot.lane.b32.xlu0 %v1338, 64
    %v1341 = vpop.permute.xlu0 %1340
    %v1343 = vadd.f32 %v1125, %v1341
    %v1344 = vtanh.pop %v1343
    %v1345 = vsub.f32 1.0, %v1331
    %1347 = vrot.lane.b32.xlu0 %v1344, 96
    %v1348 = vpop.permute.xlu0 %1347
    %v1350 = vmul.f32 %v1345, %v1348
    %v1351 = vrot.slane %v1244, 6
    %v1353 = vmul.f32 %v1331, %v1351
    %v1354 = vadd.f32 %v1350, %v1353
    %1356 = vrot.lane.b32.xlu0 %v1354, 96
    %v1357 = vpop.permute.xlu0 %1356
    %1359 = vst.msk [vmem:[#allocation2] sm:$0xc] %vm363, %v1357
    %v1360 = vrot.slane %v1354, 2
    %1361 = vrot.lane.b32.xlu0 %v1360, 96
    %v1362 = vpop.permute.xlu0 %1361
    %v1363 = vsel %vm53, %v1362, 0
    %1365 = vmatprep.subr.mxu0 0.0
    %1366 = vmatpush1.msra.mxu0 %v1134
    %1367 = vmatprep.subr.mxu0 0.0
    %1368 = vmatpush1.msra.mxu0 %v1135
    %1369 = vmatprep.subr.mxu0 0.0
    %1370 = vmatpush1.msra.mxu0 %v1136
    %1371 = vmatprep.subr.mxu0 0.0
    %1372 = vmatpush1.msra.mxu0 %v1137
    %1373 = vmatprep.subr.mxu0 0.0
    %1374 = vmatpush1.msra.mxu0 0.0
    %1375 = vmatprep.subr.mxu0 0.0
    %1376 = vmatpush1.msra.mxu0 0.0
    %1377 = vmatprep.subr.mxu0 0.0
    %1378 = vmatpush1.msra.mxu0 0.0
    %1379 = vmatprep.subr.mxu0 0.0
    %1380 = vmatpush1.msra.mxu0 0.0
    %1381 = vmatprep.subr.mxu0 0.0
    %1382 = vmatpush1.msra.mxu0 0.0
    %1383 = vmatprep.subr.mxu0 0.0
    %1384 = vmatpush1.msra.mxu0 0.0
    %1385 = vmatprep.subr.mxu0 0.0
    %1386 = vmatpush1.msra.mxu0 0.0
    %1387 = vmatprep.subr.mxu0 0.0
    %1388 = vmatpush1.msra.mxu0 0.0
    %1389 = vmatprep.subr.mxu0 0.0
    %1390 = vmatpush1.msra.mxu0 0.0
    %1391 = vmatprep.subr.mxu0 0.0
    %1392 = vmatpush1.msra.mxu0 0.0
    %1393 = vmatprep.subr.mxu0 0.0
    %1394 = vmatpush1.msra.mxu0 0.0
    %1395 = vmatprep.subr.mxu0 0.0
    %1396 = vmatpush1.msra.mxu0 0.0
    %1397 = vmatprep.subr.mxu0 0.0
    %1398 = vmatpush1.msra.mxu0 0.0
    %1399 = vmatprep.subr.mxu0 0.0
    %1400 = vmatpush1.msra.mxu0 0.0
    %1401 = vmatprep.subr.mxu0 0.0
    %1402 = vmatpush1.msra.mxu0 0.0
    %1403 = vmatprep.subr.mxu0 0.0
    %1404 = vmatpush1.msra.mxu0 0.0
    %1405 = vmatprep.subr.mxu0 0.0
    %1406 = vmatpush1.msra.mxu0 0.0
    %1407 = vmatprep.subr.mxu0 0.0
    %1408 = vmatpush1.msra.mxu0 0.0
    %1409 = vmatprep.subr.mxu0 0.0
    %1410 = vmatpush1.msra.mxu0 0.0
    %1411 = vmatprep.subr.mxu0 0.0
    %1412 = vmatpush1.msra.mxu0 0.0
    %1413 = vmatprep.subr.mxu0 0.0
    %1414 = vmatpush1.msra.mxu0 0.0
    %1415 = vmatprep.subr.mxu0 0.0
    %1416 = vmatpush1.msra.mxu0 0.0
    %1417 = vmatprep.subr.mxu0 0.0
    %1418 = vmatpush1.msra.mxu0 0.0
    %1419 = vmatprep.subr.mxu0 0.0
    %1420 = vmatpush1.msra.mxu0 0.0
    %1421 = vmatprep.subr.mxu0 0.0
    %1422 = vmatpush1.msra.mxu0 0.0
    %1423 = vmatprep.subr.mxu0 0.0
    %1424 = vmatpush1.msra.mxu0 0.0
    %1425 = vmatprep.subr.mxu0 0.0
    %1426 = vmatpush1.msra.mxu0 0.0
    %1427 = vmatprep.subr.mxu0 0.0
    %1428 = vmatpush1.msra.mxu0 0.0
    %1429 = vmatprep.mubr.f32.mxu0 0.0
    %1430 = vmatmul.mubr.f32.gmra.mrb[0].mxu0 %v1363
    %v1431 = vpop.f32.mrb[0].mxu0
    %v1432 = vadd.f32 0.0, %v1431
    %v1433 = vpop.f32.mrb[0].mxu0
    %1434 = vdwg.mxu0
    %v1436 = vrot.slane %v1432, 4
    %v1438 = vadd.f32 %v1125, %v1436
    %v1439 = vxor.u32 %v1438, 2147483648
    %v1440 = vmul.f32 %v1439, 1.442695
    %v1441 = vpow.pop %v1440
    %v1442 = vadd.f32 %v1441, 1.0
    %v1443 = vrcp.pop %v1442
    %v1444 = vmul.f32 1.0, %v1443
    %v1445 = vadd.f32 %v1432, %v1223
    %v1447 = vrot.slane %v1445, 4
    %1448 = vrot.lane.b32.xlu0 %v1447, 64
    %v1449 = vpop.permute.xlu0 %1448
    %v1451 = vmul.f32 %v1444, %v1449
    %1453 = vrot.lane.b32.xlu0 %v1451, 64
    %v1454 = vpop.permute.xlu0 %1453
    %v1456 = vadd.f32 %v1125, %v1454
    %v1457 = vtanh.pop %v1456
    %v1458 = vsub.f32 1.0, %v1444
    %1460 = vrot.lane.b32.xlu0 %v1457, 96
    %v1461 = vpop.permute.xlu0 %1460
    %v1463 = vmul.f32 %v1458, %v1461
    %v1464 = vrot.slane %v1354, 6
    %v1466 = vmul.f32 %v1444, %v1464
    %v1467 = vadd.f32 %v1463, %v1466
    %1469 = vrot.lane.b32.xlu0 %v1467, 96
    %v1470 = vpop.permute.xlu0 %1469
    %1472 = vst.msk [vmem:[#allocation2] sm:$0x30] %vm477, %v1470
    %v1473 = vrot.slane %v1467, 4
    %1474 = vrot.lane.b32.xlu0 %v1473, 96
    %v1475 = vpop.permute.xlu0 %1474
    %v1476 = vsel %vm53, %v1475, 0
    %1478 = vmatprep.subr.mxu0 0.0
    %1479 = vmatpush1.msra.mxu0 %v1134
    %1480 = vmatprep.subr.mxu0 0.0
    %1481 = vmatpush1.msra.mxu0 %v1135
    %1482 = vmatprep.subr.mxu0 0.0
    %1483 = vmatpush1.msra.mxu0 %v1136
    %1484 = vmatprep.subr.mxu0 0.0
    %1485 = vmatpush1.msra.mxu0 %v1137
    %1486 = vmatprep.subr.mxu0 0.0
    %1487 = vmatpush1.msra.mxu0 0.0
    %1488 = vmatprep.subr.mxu0 0.0
    %1489 = vmatpush1.msra.mxu0 0.0
    %1490 = vmatprep.subr.mxu0 0.0
    %1491 = vmatpush1.msra.mxu0 0.0
    %1492 = vmatprep.subr.mxu0 0.0
    %1493 = vmatpush1.msra.mxu0 0.0
    %1494 = vmatprep.subr.mxu0 0.0
    %1495 = vmatpush1.msra.mxu0 0.0
    %1496 = vmatprep.subr.mxu0 0.0
    %1497 = vmatpush1.msra.mxu0 0.0
    %1498 = vmatprep.subr.mxu0 0.0
    %1499 = vmatpush1.msra.mxu0 0.0
    %1500 = vmatprep.subr.mxu0 0.0
    %1501 = vmatpush1.msra.mxu0 0.0
    %1502 = vmatprep.subr.mxu0 0.0
    %1503 = vmatpush1.msra.mxu0 0.0
    %1504 = vmatprep.subr.mxu0 0.0
    %1505 = vmatpush1.msra.mxu0 0.0
    %1506 = vmatprep.subr.mxu0 0.0
    %1507 = vmatpush1.msra.mxu0 0.0
    %1508 = vmatprep.subr.mxu0 0.0
    %1509 = vmatpush1.msra.mxu0 0.0
    %1510 = vmatprep.subr.mxu0 0.0
    %1511 = vmatpush1.msra.mxu0 0.0
    %1512 = vmatprep.subr.mxu0 0.0
    %1513 = vmatpush1.msra.mxu0 0.0
    %1514 = vmatprep.subr.mxu0 0.0
    %1515 = vmatpush1.msra.mxu0 0.0
    %1516 = vmatprep.subr.mxu0 0.0
    %1517 = vmatpush1.msra.mxu0 0.0
    %1518 = vmatprep.subr.mxu0 0.0
    %1519 = vmatpush1.msra.mxu0 0.0
    %1520 = vmatprep.subr.mxu0 0.0
    %1521 = vmatpush1.msra.mxu0 0.0
    %1522 = vmatprep.subr.mxu0 0.0
    %1523 = vmatpush1.msra.mxu0 0.0
    %1524 = vmatprep.subr.mxu0 0.0
    %1525 = vmatpush1.msra.mxu0 0.0
    %1526 = vmatprep.subr.mxu0 0.0
    %1527 = vmatpush1.msra.mxu0 0.0
    %1528 = vmatprep.subr.mxu0 0.0
    %1529 = vmatpush1.msra.mxu0 0.0
    %1530 = vmatprep.subr.mxu0 0.0
    %1531 = vmatpush1.msra.mxu0 0.0
    %1532 = vmatprep.subr.mxu0 0.0
    %1533 = vmatpush1.msra.mxu0 0.0
    %1534 = vmatprep.subr.mxu0 0.0
    %1535 = vmatpush1.msra.mxu0 0.0
    %1536 = vmatprep.subr.mxu0 0.0
    %1537 = vmatpush1.msra.mxu0 0.0
    %1538 = vmatprep.subr.mxu0 0.0
    %1539 = vmatpush1.msra.mxu0 0.0
    %1540 = vmatprep.subr.mxu0 0.0
    %1541 = vmatpush1.msra.mxu0 0.0
    %1542 = vmatprep.mubr.f32.mxu0 0.0
    %1543 = vmatmul.mubr.f32.gmra.mrb[0].mxu0 %v1476
    %v1544 = vpop.f32.mrb[0].mxu0
    %v1545 = vadd.f32 0.0, %v1544
    %v1546 = vpop.f32.mrb[0].mxu0
    %1547 = vdwg.mxu0
    %v1549 = vrot.slane %v1545, 2
    %v1551 = vadd.f32 %v1125, %v1549
    %v1552 = vxor.u32 %v1551, 2147483648
    %v1553 = vmul.f32 %v1552, 1.442695
    %v1554 = vpow.pop %v1553
    %v1555 = vadd.f32 %v1554, 1.0
    %v1556 = vrcp.pop %v1555
    %v1557 = vmul.f32 1.0, %v1556
    %v1558 = vadd.f32 %v1545, %v1223
    %v1560 = vrot.slane %v1558, 2
    %1561 = vrot.lane.b32.xlu0 %v1560, 64
    %v1562 = vpop.permute.xlu0 %1561
    %v1564 = vmul.f32 %v1557, %v1562
    %1566 = vrot.lane.b32.xlu0 %v1564, 64
    %v1567 = vpop.permute.xlu0 %1566
    %v1569 = vadd.f32 %v1125, %v1567
    %v1570 = vtanh.pop %v1569
    %v1571 = vsub.f32 1.0, %v1557
    %1573 = vrot.lane.b32.xlu0 %v1570, 96
    %v1574 = vpop.permute.xlu0 %1573
    %v1576 = vmul.f32 %v1571, %v1574
    %v1577 = vrot.slane %v1467, 6
    %v1579 = vmul.f32 %v1557, %v1577
    %v1580 = vadd.f32 %v1576, %v1579
    %1582 = vrot.lane.b32.xlu0 %v1580, 96
    %v1583 = vpop.permute.xlu0 %1582
    %1585 = vst.msk [vmem:[#allocation2] sm:$0xc0] %vm591, %v1583
    %v1586 = vrot.slane %v1580, 6
    %1587 = vrot.lane.b32.xlu0 %v1586, 96
    %v1588 = vpop.permute.xlu0 %1587
    %v1589 = vsel %vm53, %v1588, 0
    %1591 = vmatprep.subr.mxu0 0.0
    %1592 = vmatpush1.msra.mxu0 %v1134
    %1593 = vmatprep.subr.mxu0 0.0
    %1594 = vmatpush1.msra.mxu0 %v1135
    %1595 = vmatprep.subr.mxu0 0.0
    %1596 = vmatpush1.msra.mxu0 %v1136
    %1597 = vmatprep.subr.mxu0 0.0
    %1598 = vmatpush1.msra.mxu0 %v1137
    %1599 = vmatprep.subr.mxu0 0.0
    %1600 = vmatpush1.msra.mxu0 0.0
    %1601 = vmatprep.subr.mxu0 0.0
    %1602 = vmatpush1.msra.mxu0 0.0
    %1603 = vmatprep.subr.mxu0 0.0
    %1604 = vmatpush1.msra.mxu0 0.0
    %1605 = vmatprep.subr.mxu0 0.0
    %1606 = vmatpush1.msra.mxu0 0.0
    %1607 = vmatprep.subr.mxu0 0.0
    %1608 = vmatpush1.msra.mxu0 0.0
    %1609 = vmatprep.subr.mxu0 0.0
    %1610 = vmatpush1.msra.mxu0 0.0
    %1611 = vmatprep.subr.mxu0 0.0
    %1612 = vmatpush1.msra.mxu0 0.0
    %1613 = vmatprep.subr.mxu0 0.0
    %1614 = vmatpush1.msra.mxu0 0.0
    %1615 = vmatprep.subr.mxu0 0.0
    %1616 = vmatpush1.msra.mxu0 0.0
    %1617 = vmatprep.subr.mxu0 0.0
    %1618 = vmatpush1.msra.mxu0 0.0
    %1619 = vmatprep.subr.mxu0 0.0
    %1620 = vmatpush1.msra.mxu0 0.0
    %1621 = vmatprep.subr.mxu0 0.0
    %1622 = vmatpush1.msra.mxu0 0.0
    %1623 = vmatprep.subr.mxu0 0.0
    %1624 = vmatpush1.msra.mxu0 0.0
    %1625 = vmatprep.subr.mxu0 0.0
    %1626 = vmatpush1.msra.mxu0 0.0
    %1627 = vmatprep.subr.mxu0 0.0
    %1628 = vmatpush1.msra.mxu0 0.0
    %1629 = vmatprep.subr.mxu0 0.0
    %1630 = vmatpush1.msra.mxu0 0.0
    %1631 = vmatprep.subr.mxu0 0.0
    %1632 = vmatpush1.msra.mxu0 0.0
    %1633 = vmatprep.subr.mxu0 0.0
    %1634 = vmatpush1.msra.mxu0 0.0
    %1635 = vmatprep.subr.mxu0 0.0
    %1636 = vmatpush1.msra.mxu0 0.0
    %1637 = vmatprep.subr.mxu0 0.0
    %1638 = vmatpush1.msra.mxu0 0.0
    %1639 = vmatprep.subr.mxu0 0.0
    %1640 = vmatpush1.msra.mxu0 0.0
    %1641 = vmatprep.subr.mxu0 0.0
    %1642 = vmatpush1.msra.mxu0 0.0
    %1643 = vmatprep.subr.mxu0 0.0
    %1644 = vmatpush1.msra.mxu0 0.0
    %1645 = vmatprep.subr.mxu0 0.0
    %1646 = vmatpush1.msra.mxu0 0.0
    %1647 = vmatprep.subr.mxu0 0.0
    %1648 = vmatpush1.msra.mxu0 0.0
    %1649 = vmatprep.subr.mxu0 0.0
    %1650 = vmatpush1.msra.mxu0 0.0
    %1651 = vmatprep.subr.mxu0 0.0
    %1652 = vmatpush1.msra.mxu0 0.0
    %1653 = vmatprep.subr.mxu0 0.0
    %1654 = vmatpush1.msra.mxu0 0.0
    %1655 = vmatprep.mubr.f32.mxu0 0.0
    %1656 = vmatmul.mubr.f32.gmra.mrb[0].mxu0 %v1589
    %v1657 = vpop.f32.mrb[0].mxu0
    %v1658 = vadd.f32 0.0, %v1657
    %v1659 = vpop.f32.mrb[0].mxu0
    %1660 = vdwg.mxu0
    %v1661 = vadd.f32 %v1130, %v1658
    %v1662 = vxor.u32 %v1661, 2147483648
    %v1663 = vmul.f32 %v1662, 1.442695
    %v1664 = vpow.pop %v1663
    %v1665 = vadd.f32 %v1664, 1.0
    %v1666 = vrcp.pop %v1665
    %v1667 = vmul.f32 1.0, %v1666
    %v1668 = vadd.f32 %v1658, %v1223
    %1670 = vrot.lane.b32.xlu0 %v1668, 64
    %v1671 = vpop.permute.xlu0 %1670
    %v1673 = vmul.f32 %v1667, %v1671
    %1675 = vrot.lane.b32.xlu0 %v1673, 64
    %v1676 = vpop.permute.xlu0 %1675
    %v1678 = vadd.f32 %v1130, %v1676
    %v1679 = vtanh.pop %v1678
    %v1680 = vsub.f32 1.0, %v1667
    %1682 = vrot.lane.b32.xlu0 %v1679, 96
    %v1683 = vpop.permute.xlu0 %1682
    %v1685 = vmul.f32 %v1680, %v1683
    %v1687 = vmul.f32 %v1667, %v1586
    %v1688 = vadd.f32 %v1685, %v1687
    %1690 = vrot.lane.b32.xlu0 %v1688, 96
    %v1691 = vpop.permute.xlu0 %1690
    %1693 = vst.msk [vmem:[#allocation2 + $0x8] sm:$0x3] %vm252, %v1691
    %v1694 = vsel %vm53, %v1691, 0
    %1696 = vmatprep.subr.mxu0 0.0
    %1697 = vmatpush1.msra.mxu0 %v1134
    %1698 = vmatprep.subr.mxu0 0.0
    %1699 = vmatpush1.msra.mxu0 %v1135
    %1700 = vmatprep.subr.mxu0 0.0
    %1701 = vmatpush1.msra.mxu0 %v1136
    %1702 = vmatprep.subr.mxu0 0.0
    %1703 = vmatpush1.msra.mxu0 %v1137
    %1704 = vmatprep.subr.mxu0 0.0
    %1705 = vmatpush1.msra.mxu0 0.0
    %1706 = vmatprep.subr.mxu0 0.0
    %1707 = vmatpush1.msra.mxu0 0.0
    %1708 = vmatprep.subr.mxu0 0.0
    %1709 = vmatpush1.msra.mxu0 0.0
    %1710 = vmatprep.subr.mxu0 0.0
    %1711 = vmatpush1.msra.mxu0 0.0
    %1712 = vmatprep.subr.mxu0 0.0
    %1713 = vmatpush1.msra.mxu0 0.0
    %1714 = vmatprep.subr.mxu0 0.0
    %1715 = vmatpush1.msra.mxu0 0.0
    %1716 = vmatprep.subr.mxu0 0.0
    %1717 = vmatpush1.msra.mxu0 0.0
    %1718 = vmatprep.subr.mxu0 0.0
    %1719 = vmatpush1.msra.mxu0 0.0
    %1720 = vmatprep.subr.mxu0 0.0
    %1721 = vmatpush1.msra.mxu0 0.0
    %1722 = vmatprep.subr.mxu0 0.0
    %1723 = vmatpush1.msra.mxu0 0.0
    %1724 = vmatprep.subr.mxu0 0.0
    %1725 = vmatpush1.msra.mxu0 0.0
    %1726 = vmatprep.subr.mxu0 0.0
    %1727 = vmatpush1.msra.mxu0 0.0
    %1728 = vmatprep.subr.mxu0 0.0
    %1729 = vmatpush1.msra.mxu0 0.0
    %1730 = vmatprep.subr.mxu0 0.0
    %1731 = vmatpush1.msra.mxu0 0.0
    %1732 = vmatprep.subr.mxu0 0.0
    %1733 = vmatpush1.msra.mxu0 0.0
    %1734 = vmatprep.subr.mxu0 0.0
    %1735 = vmatpush1.msra.mxu0 0.0
    %1736 = vmatprep.subr.mxu0 0.0
    %1737 = vmatpush1.msra.mxu0 0.0
    %1738 = vmatprep.subr.mxu0 0.0
    %1739 = vmatpush1.msra.mxu0 0.0
    %1740 = vmatprep.subr.mxu0 0.0
    %1741 = vmatpush1.msra.mxu0 0.0
    %1742 = vmatprep.subr.mxu0 0.0
    %1743 = vmatpush1.msra.mxu0 0.0
    %1744 = vmatprep.subr.mxu0 0.0
    %1745 = vmatpush1.msra.mxu0 0.0
    %1746 = vmatprep.subr.mxu0 0.0
    %1747 = vmatpush1.msra.mxu0 0.0
    %1748 = vmatprep.subr.mxu0 0.0
    %1749 = vmatpush1.msra.mxu0 0.0
    %1750 = vmatprep.subr.mxu0 0.0
    %1751 = vmatpush1.msra.mxu0 0.0
    %1752 = vmatprep.subr.mxu0 0.0
    %1753 = vmatpush1.msra.mxu0 0.0
    %1754 = vmatprep.subr.mxu0 0.0
    %1755 = vmatpush1.msra.mxu0 0.0
    %1756 = vmatprep.subr.mxu0 0.0
    %1757 = vmatpush1.msra.mxu0 0.0
    %1758 = vmatprep.subr.mxu0 0.0
    %1759 = vmatpush1.msra.mxu0 0.0
    %1760 = vmatprep.mubr.f32.mxu0 0.0
    %1761 = vmatmul.mubr.f32.gmra.mrb[0].mxu0 %v1694
    %v1762 = vpop.f32.mrb[0].mxu0
    %v1763 = vadd.f32 0.0, %v1762
    %v1764 = vpop.f32.mrb[0].mxu0
    %1765 = vdwg.mxu0
    %v1767 = vrot.slane %v1763, 6
    %v1769 = vadd.f32 %v1130, %v1767
    %v1770 = vxor.u32 %v1769, 2147483648
    %v1771 = vmul.f32 %v1770, 1.442695
    %v1772 = vpow.pop %v1771
    %v1773 = vadd.f32 %v1772, 1.0
    %v1774 = vrcp.pop %v1773
    %v1775 = vmul.f32 1.0, %v1774
    %v1776 = vadd.f32 %v1763, %v1223
    %v1778 = vrot.slane %v1776, 6
    %1779 = vrot.lane.b32.xlu0 %v1778, 64
    %v1780 = vpop.permute.xlu0 %1779
    %v1782 = vmul.f32 %v1775, %v1780
    %1784 = vrot.lane.b32.xlu0 %v1782, 64
    %v1785 = vpop.permute.xlu0 %1784
    %v1787 = vadd.f32 %v1130, %v1785
    %v1788 = vtanh.pop %v1787
    %v1789 = vsub.f32 1.0, %v1775
    %1791 = vrot.lane.b32.xlu0 %v1788, 96
    %v1792 = vpop.permute.xlu0 %1791
    %v1794 = vmul.f32 %v1789, %v1792
    %v1795 = vrot.slane %v1688, 6
    %v1797 = vmul.f32 %v1775, %v1795
    %v1798 = vadd.f32 %v1794, %v1797
    %1800 = vrot.lane.b32.xlu0 %v1798, 96
    %v1801 = vpop.permute.xlu0 %1800
    %1803 = vst.msk [vmem:[#allocation2 + $0x8] sm:$0xc] %vm363, %v1801
    %v1804 = vrot.slane %v1798, 2
    %1805 = vrot.lane.b32.xlu0 %v1804, 96
    %v1806 = vpop.permute.xlu0 %1805
    %v1807 = vsel %vm53, %v1806, 0
    %1809 = vmatprep.subr.mxu0 0.0
    %1810 = vmatpush1.msra.mxu0 %v1134
    %1811 = vmatprep.subr.mxu0 0.0
    %1812 = vmatpush1.msra.mxu0 %v1135
    %1813 = vmatprep.subr.mxu0 0.0
    %1814 = vmatpush1.msra.mxu0 %v1136
    %1815 = vmatprep.subr.mxu0 0.0
    %1816 = vmatpush1.msra.mxu0 %v1137
    %1817 = vmatprep.subr.mxu0 0.0
    %1818 = vmatpush1.msra.mxu0 0.0
    %1819 = vmatprep.subr.mxu0 0.0
    %1820 = vmatpush1.msra.mxu0 0.0
    %1821 = vmatprep.subr.mxu0 0.0
    %1822 = vmatpush1.msra.mxu0 0.0
    %1823 = vmatprep.subr.mxu0 0.0
    %1824 = vmatpush1.msra.mxu0 0.0
    %1825 = vmatprep.subr.mxu0 0.0
    %1826 = vmatpush1.msra.mxu0 0.0
    %1827 = vmatprep.subr.mxu0 0.0
    %1828 = vmatpush1.msra.mxu0 0.0
    %1829 = vmatprep.subr.mxu0 0.0
    %1830 = vmatpush1.msra.mxu0 0.0
    %1831 = vmatprep.subr.mxu0 0.0
    %1832 = vmatpush1.msra.mxu0 0.0
    %1833 = vmatprep.subr.mxu0 0.0
    %1834 = vmatpush1.msra.mxu0 0.0
    %1835 = vmatprep.subr.mxu0 0.0
    %1836 = vmatpush1.msra.mxu0 0.0
    %1837 = vmatprep.subr.mxu0 0.0
    %1838 = vmatpush1.msra.mxu0 0.0
    %1839 = vmatprep.subr.mxu0 0.0
    %1840 = vmatpush1.msra.mxu0 0.0
    %1841 = vmatprep.subr.mxu0 0.0
    %1842 = vmatpush1.msra.mxu0 0.0
    %1843 = vmatprep.subr.mxu0 0.0
    %1844 = vmatpush1.msra.mxu0 0.0
    %1845 = vmatprep.subr.mxu0 0.0
    %1846 = vmatpush1.msra.mxu0 0.0
    %1847 = vmatprep.subr.mxu0 0.0
    %1848 = vmatpush1.msra.mxu0 0.0
    %1849 = vmatprep.subr.mxu0 0.0
    %1850 = vmatpush1.msra.mxu0 0.0
    %1851 = vmatprep.subr.mxu0 0.0
    %1852 = vmatpush1.msra.mxu0 0.0
    %1853 = vmatprep.subr.mxu0 0.0
    %1854 = vmatpush1.msra.mxu0 0.0
    %1855 = vmatprep.subr.mxu0 0.0
    %1856 = vmatpush1.msra.mxu0 0.0
    %1857 = vmatprep.subr.mxu0 0.0
    %1858 = vmatpush1.msra.mxu0 0.0
    %1859 = vmatprep.subr.mxu0 0.0
    %1860 = vmatpush1.msra.mxu0 0.0
    %1861 = vmatprep.subr.mxu0 0.0
    %1862 = vmatpush1.msra.mxu0 0.0
    %1863 = vmatprep.subr.mxu0 0.0
    %1864 = vmatpush1.msra.mxu0 0.0
    %1865 = vmatprep.subr.mxu0 0.0
    %1866 = vmatpush1.msra.mxu0 0.0
    %1867 = vmatprep.subr.mxu0 0.0
    %1868 = vmatpush1.msra.mxu0 0.0
    %1869 = vmatprep.subr.mxu0 0.0
    %1870 = vmatpush1.msra.mxu0 0.0
    %1871 = vmatprep.subr.mxu0 0.0
    %1872 = vmatpush1.msra.mxu0 0.0
    %1873 = vmatprep.mubr.f32.mxu0 0.0
    %1874 = vmatmul.mubr.f32.gmra.mrb[0].mxu0 %v1807
    %v1875 = vpop.f32.mrb[0].mxu0
    %v1876 = vadd.f32 0.0, %v1875
    %v1877 = vpop.f32.mrb[0].mxu0
    %1878 = vdwg.mxu0
    %v1880 = vrot.slane %v1876, 4
    %v1882 = vadd.f32 %v1130, %v1880
    %v1883 = vxor.u32 %v1882, 2147483648
    %v1884 = vmul.f32 %v1883, 1.442695
    %v1885 = vpow.pop %v1884
    %v1886 = vadd.f32 %v1885, 1.0
    %v1887 = vrcp.pop %v1886
    %v1888 = vmul.f32 1.0, %v1887
    %v1889 = vadd.f32 %v1876, %v1223
    %v1891 = vrot.slane %v1889, 4
    %1892 = vrot.lane.b32.xlu0 %v1891, 64
    %v1893 = vpop.permute.xlu0 %1892
    %v1895 = vmul.f32 %v1888, %v1893
    %1897 = vrot.lane.b32.xlu0 %v1895, 64
    %v1898 = vpop.permute.xlu0 %1897
    %v1900 = vadd.f32 %v1130, %v1898
    %v1901 = vtanh.pop %v1900
    %v1902 = vsub.f32 1.0, %v1888
    %1904 = vrot.lane.b32.xlu0 %v1901, 96
    %v1905 = vpop.permute.xlu0 %1904
    %v1907 = vmul.f32 %v1902, %v1905
    %v1908 = vrot.slane %v1798, 6
    %v1910 = vmul.f32 %v1888, %v1908
    %v1911 = vadd.f32 %v1907, %v1910
    %1913 = vrot.lane.b32.xlu0 %v1911, 96
    %v1914 = vpop.permute.xlu0 %1913
    %1916 = vst.msk [vmem:[#allocation2 + $0x8] sm:$0x30] %vm477, %v1914
    %v1917 = vrot.slane %v1911, 4
    %1918 = vrot.lane.b32.xlu0 %v1917, 96
    %v1919 = vpop.permute.xlu0 %1918
    %v1920 = vsel %vm53, %v1919, 0
    %1922 = vmatprep.subr.mxu0 0.0
    %1923 = vmatpush1.msra.mxu0 %v1134
    %1924 = vmatprep.subr.mxu0 0.0
    %1925 = vmatpush1.msra.mxu0 %v1135
    %1926 = vmatprep.subr.mxu0 0.0
    %1927 = vmatpush1.msra.mxu0 %v1136
    %1928 = vmatprep.subr.mxu0 0.0
    %1929 = vmatpush1.msra.mxu0 %v1137
    %1930 = vmatprep.subr.mxu0 0.0
    %1931 = vmatpush1.msra.mxu0 0.0
    %1932 = vmatprep.subr.mxu0 0.0
    %1933 = vmatpush1.msra.mxu0 0.0
    %1934 = vmatprep.subr.mxu0 0.0
    %1935 = vmatpush1.msra.mxu0 0.0
    %1936 = vmatprep.subr.mxu0 0.0
    %1937 = vmatpush1.msra.mxu0 0.0
    %1938 = vmatprep.subr.mxu0 0.0
    %1939 = vmatpush1.msra.mxu0 0.0
    %1940 = vmatprep.subr.mxu0 0.0
    %1941 = vmatpush1.msra.mxu0 0.0
    %1942 = vmatprep.subr.mxu0 0.0
    %1943 = vmatpush1.msra.mxu0 0.0
    %1944 = vmatprep.subr.mxu0 0.0
    %1945 = vmatpush1.msra.mxu0 0.0
    %1946 = vmatprep.subr.mxu0 0.0
    %1947 = vmatpush1.msra.mxu0 0.0
    %1948 = vmatprep.subr.mxu0 0.0
    %1949 = vmatpush1.msra.mxu0 0.0
    %1950 = vmatprep.subr.mxu0 0.0
    %1951 = vmatpush1.msra.mxu0 0.0
    %1952 = vmatprep.subr.mxu0 0.0
    %1953 = vmatpush1.msra.mxu0 0.0
    %1954 = vmatprep.subr.mxu0 0.0
    %1955 = vmatpush1.msra.mxu0 0.0
    %1956 = vmatprep.subr.mxu0 0.0
    %1957 = vmatpush1.msra.mxu0 0.0
    %1958 = vmatprep.subr.mxu0 0.0
    %1959 = vmatpush1.msra.mxu0 0.0
    %1960 = vmatprep.subr.mxu0 0.0
    %1961 = vmatpush1.msra.mxu0 0.0
    %1962 = vmatprep.subr.mxu0 0.0
    %1963 = vmatpush1.msra.mxu0 0.0
    %1964 = vmatprep.subr.mxu0 0.0
    %1965 = vmatpush1.msra.mxu0 0.0
    %1966 = vmatprep.subr.mxu0 0.0
    %1967 = vmatpush1.msra.mxu0 0.0
    %1968 = vmatprep.subr.mxu0 0.0
    %1969 = vmatpush1.msra.mxu0 0.0
    %1970 = vmatprep.subr.mxu0 0.0
    %1971 = vmatpush1.msra.mxu0 0.0
    %1972 = vmatprep.subr.mxu0 0.0
    %1973 = vmatpush1.msra.mxu0 0.0
    %1974 = vmatprep.subr.mxu0 0.0
    %1975 = vmatpush1.msra.mxu0 0.0
    %1976 = vmatprep.subr.mxu0 0.0
    %1977 = vmatpush1.msra.mxu0 0.0
    %1978 = vmatprep.subr.mxu0 0.0
    %1979 = vmatpush1.msra.mxu0 0.0
    %1980 = vmatprep.subr.mxu0 0.0
    %1981 = vmatpush1.msra.mxu0 0.0
    %1982 = vmatprep.subr.mxu0 0.0
    %1983 = vmatpush1.msra.mxu0 0.0
    %1984 = vmatprep.subr.mxu0 0.0
    %1985 = vmatpush1.msra.mxu0 0.0
    %1986 = vmatprep.mubr.f32.mxu0 0.0
    %1987 = vmatmul.mubr.f32.gmra.mrb[0].mxu0 %v1920
    %v1988 = vpop.f32.mrb[0].mxu0
    %v1989 = vadd.f32 0.0, %v1988
    %v1990 = vpop.f32.mrb[0].mxu0
    %1991 = vdwg.mxu0
    %v1993 = vrot.slane %v1989, 2
    %v1995 = vadd.f32 %v1130, %v1993
    %v1996 = vxor.u32 %v1995, 2147483648
    %v1997 = vmul.f32 %v1996, 1.442695
    %v1998 = vpow.pop %v1997
    %v1999 = vadd.f32 %v1998, 1.0
    %v2000 = vrcp.pop %v1999
    %v2001 = vmul.f32 1.0, %v2000
    %v2002 = vadd.f32 %v1989, %v1223
    %v2004 = vrot.slane %v2002, 2
    %2005 = vrot.lane.b32.xlu0 %v2004, 64
    %v2006 = vpop.permute.xlu0 %2005
    %v2008 = vmul.f32 %v2001, %v2006
    %2010 = vrot.lane.b32.xlu0 %v2008, 64
    %v2011 = vpop.permute.xlu0 %2010
    %v2013 = vadd.f32 %v1130, %v2011
    %v2014 = vtanh.pop %v2013
    %v2015 = vsub.f32 1.0, %v2001
    %2017 = vrot.lane.b32.xlu0 %v2014, 96
    %v2018 = vpop.permute.xlu0 %2017
    %v2020 = vmul.f32 %v2015, %v2018
    %v2021 = vrot.slane %v1911, 6
    %v2023 = vmul.f32 %v2001, %v2021
    %v2024 = vadd.f32 %v2020, %v2023
    %2026 = vrot.lane.b32.xlu0 %v2024, 96
    %v2027 = vpop.permute.xlu0 %2026
    %2029 = vst.msk [vmem:[#allocation2 + $0x8] sm:$0xc0] %vm591, %v2027
    %v2030 = vld [vmem:[#allocation2] sm:$0xff]
    %v2031 = vld [vmem:[#allocation2 + $0x8] sm:$0xff]
    %v2032 = vld [vmem:[%s5] sm:$0xff]
    %v2033 = vld [vmem:[%s5 + $0x8] sm:$0xff]
    %v2034 = vld [vmem:[%s5 + $0x10] sm:$0xff]
    %v2035 = vld [vmem:[%s5 + $0x18] sm:$0xff]
    %v2036 = vld [vmem:[%s6] sm:$0x1]
    %v2038 = vlaneseq
    %v2039 = vshrl.u32 %v2038, 7
    %v2040 = vsub.s32 0, %v2039
    %v2041 = vrot.slane %v2036, %v2040
    %v2044 = vsel %vm53, %v2030, 0
    %v2047 = vsel %vm53, %v2031, 0
    %2049 = vmatprep.subr.mxu0 0.0
    %2050 = vmatpush1.msra.mxu0 %v2032
    %2051 = vmatprep.subr.mxu0 0.0
    %2052 = vmatpush1.msra.mxu0 %v2033
    %2053 = vmatprep.subr.mxu0 0.0
    %2054 = vmatpush1.msra.mxu0 %v2034
    %2055 = vmatprep.subr.mxu0 0.0
    %2056 = vmatpush1.msra.mxu0 %v2035
    %2057 = vmatprep.subr.mxu0 0.0
    %2058 = vmatpush1.msra.mxu0 0.0
    %2059 = vmatprep.subr.mxu0 0.0
    %2060 = vmatpush1.msra.mxu0 0.0
    %2061 = vmatprep.subr.mxu0 0.0
    %2062 = vmatpush1.msra.mxu0 0.0
    %2063 = vmatprep.subr.mxu0 0.0
    %2064 = vmatpush1.msra.mxu0 0.0
    %2065 = vmatprep.subr.mxu0 0.0
    %2066 = vmatpush1.msra.mxu0 0.0
    %2067 = vmatprep.subr.mxu0 0.0
    %2068 = vmatpush1.msra.mxu0 0.0
    %2069 = vmatprep.subr.mxu0 0.0
    %2070 = vmatpush1.msra.mxu0 0.0
    %2071 = vmatprep.subr.mxu0 0.0
    %2072 = vmatpush1.msra.mxu0 0.0
    %2073 = vmatprep.subr.mxu0 0.0
    %2074 = vmatpush1.msra.mxu0 0.0
    %2075 = vmatprep.subr.mxu0 0.0
    %2076 = vmatpush1.msra.mxu0 0.0
    %2077 = vmatprep.subr.mxu0 0.0
    %2078 = vmatpush1.msra.mxu0 0.0
    %2079 = vmatprep.subr.mxu0 0.0
    %2080 = vmatpush1.msra.mxu0 0.0
    %2081 = vmatprep.subr.mxu0 0.0
    %2082 = vmatpush1.msra.mxu0 0.0
    %2083 = vmatprep.subr.mxu0 0.0
    %2084 = vmatpush1.msra.mxu0 0.0
    %2085 = vmatprep.subr.mxu0 0.0
    %2086 = vmatpush1.msra.mxu0 0.0
    %2087 = vmatprep.subr.mxu0 0.0
    %2088 = vmatpush1.msra.mxu0 0.0
    %2089 = vmatprep.subr.mxu0 0.0
    %2090 = vmatpush1.msra.mxu0 0.0
    %2091 = vmatprep.subr.mxu0 0.0
    %2092 = vmatpush1.msra.mxu0 0.0
    %2093 = vmatprep.subr.mxu0 0.0
    %2094 = vmatpush1.msra.mxu0 0.0
    %2095 = vmatprep.subr.mxu0 0.0
    %2096 = vmatpush1.msra.mxu0 0.0
    %2097 = vmatprep.subr.mxu0 0.0
    %2098 = vmatpush1.msra.mxu0 0.0
    %2099 = vmatprep.subr.mxu0 0.0
    %2100 = vmatpush1.msra.mxu0 0.0
    %2101 = vmatprep.subr.mxu0 0.0
    %2102 = vmatpush1.msra.mxu0 0.0
    %2103 = vmatprep.subr.mxu0 0.0
    %2104 = vmatpush1.msra.mxu0 0.0
    %2105 = vmatprep.subr.mxu0 0.0
    %2106 = vmatpush1.msra.mxu0 0.0
    %2107 = vmatprep.subr.mxu0 0.0
    %2108 = vmatpush1.msra.mxu0 0.0
    %2109 = vmatprep.subr.mxu0 0.0
    %2110 = vmatpush1.msra.mxu0 0.0
    %2111 = vmatprep.subr.mxu0 0.0
    %2112 = vmatpush1.msra.mxu0 0.0
    %2113 = vmatprep.mubr.f32.mxu0 0.0
    %2114 = vmatmul.mubr.f32.gmra.mrb[0].mxu0 %v2044
    %v2115 = vpop.f32.mrb[0].mxu0
    %v2116 = vadd.f32 %v2041, %v2115
    %v2117 = vpop.f32.mrb[0].mxu0
    %2118 = vmatprep.mubr.f32.mxu0 0.0
    %2119 = vmatmul.mubr.f32.gmra.mrb[0].mxu0 %v2047
    %v2120 = vpop.f32.mrb[0].mxu0
    %v2121 = vadd.f32 %v2041, %v2120
    %v2122 = vpop.f32.mrb[0].mxu0
    %2123 = vdwg.mxu0
    %v2124 = vxor.u32 %v2116, 2147483648
    %v2125 = vxor.u32 %v2121, 2147483648
    %v2126 = vmul.f32 %v2124, 1.442695
    %v2127 = vpow.pop %v2126
    %v2128 = vmul.f32 %v2125, 1.442695
    %v2129 = vpow.pop %v2128
    %v2130 = vadd.f32 %v2127, 1.0
    %v2131 = vadd.f32 %v2129, 1.0
    %v2132 = vrcp.pop %v2130
    %v2133 = vmul.f32 1.0, %v2132
    %v2134 = vrcp.pop %v2131
    %v2135 = vmul.f32 1.0, %v2134
    %vm2136 = vcmask 31744
    %2137 = vst.msk [vmem:[%s7] sm:$0xff] %vm2136, %v2133
    %2138 = vst.msk [vmem:[%s7 + $0x8] sm:$0xff] %vm2136, %v2135
    // Predicated region
    $region34: #{recovery_forward.1} parent=1 // pred_check
      _
    $region35: #{recovery_forward.1} parent=1 // pred_check_branch
      %2140 = sbr.rel (0) target = $region37
    $region36: #{recovery_forward.1} parent=1 // pred_region
      _
    $region37: #{recovery_forward.1} parent=1 // pred_fallthru
      _
    // Predicated region
    $region38: #{recovery_forward.1} parent=1 // pred_check
      _
    $region39: #{recovery_forward.1} parent=1 // pred_check_branch
      %2142 = sbr.rel (0) target = $region41
    $region40: #{recovery_forward.1} parent=1 // pred_region
      _
    $region41: #{recovery_forward.1} parent=1 // pred_fallthru
      _
    %2143 = vsyncpa [#allocation4], 1

</llo_original>
